<compile_context>
chip_gen: v5e
topology: v5e:2x2
jax: 0.10.0
libtpu: 0.0.40
codegen_flags: <defaults>
</compile_context>

<pallas_src>
import math

import jax
import jax.numpy as jnp
import numpy as np
from jax.experimental import pallas as pl
from jax.experimental.pallas import tpu as pltpu


def log_filter_np(sig: float = 1.0) -> np.ndarray:
    """Deterministic Laplacian-of-Gaussian kernel (stand-in for utils.LoG)."""
    # TODO(synk): original utils.LoG unavailable; this uses the standard LoG formula.
    k = int(2 * math.ceil(3.0 * sig) + 1)            # 7 for sig = 1.0
    half = k // 2
    ys, xs = np.mgrid[-half:half + 1, -half:half + 1].astype(np.float64)
    r2 = xs ** 2 + ys ** 2
    log = -(1.0 / (math.pi * sig ** 4)) * (1.0 - r2 / (2.0 * sig ** 2)) \
          * np.exp(-r2 / (2.0 * sig ** 2))
    return log.astype(np.float32)


def build_preprocess(log2d: np.ndarray, N: int, C: int, H: int, W: int):
    """Returns jitted fn(x: (N,C,H,W) f32) -> tanh(2*pi*depthwise_conv2d(x, LoG))."""
    K = log2d.shape[-1]
    assert log2d.shape == (K, K) and K % 2 == 1
    p = K // 2
    Hp = H + 2 * p                                   # padded height (22)
    S = W + 2 * p                                    # padded width of one slab (22)
    NS = N * C                                       # number of (image, channel) slabs (8)
    SP = -(-S // 32) * 32                            # per-slab lane stride >= S (32)
    ACC_W = NS * SP                                  # packed output width (256)
    SCR_W = -(-(ACC_W + K - 1) // 128) * 128         # lane-padded input width (384)
    assert ACC_W % 128 == 0                          # lane-dense -> unmasked stores

    # The module uses one frozen LoG filter repeated across all channels, so bake
    # the taps (2*pi folded in) as Python float constants: pure VPU constant MACs.
    taps = [[float(2.0 * math.pi * log2d[di, dj]) for dj in range(K)]
            for di in range(K)]

    def kernel(xp_ref, o_ref):
        # xp_ref: (Hp, SCR_W)  all N*C slabs packed along lanes at stride SP,
        #                       spatially zero-padded; lanes >= NS*SP are zero.
        # o_ref : (H, ACC_W)   raw packed result (valid columns are q < W per slab).
        # Four rotating accumulators give ILP across the 49 taps.
        accs = [jnp.zeros((H, ACC_W), jnp.float32) for _ in range(4)]
        t = 0
        for di in range(K):
            # One sublane-offset row view per di (K loads total, reused for all dj).
            row = xp_ref[di:di + H, :]                               # (H, SCR_W)
            for dj in range(K):
                # Lane shift (XLU) + constant-tap MAC (VPU).  SP >= S guarantees the
                # shift never bleeds across slabs for the valid output columns q < W.
                accs[t & 3] = accs[t & 3] + taps[di][dj] * row[:, dj:dj + ACC_W]
                t += 1
        acc = (accs[0] + accs[1]) + (accs[2] + accs[3])
        # tanh on the EUP; single lane-dense (H, 256) unmasked store.
        o_ref[...] = jnp.tanh(acc).astype(o_ref.dtype)

    cost = pl.CostEstimate(
        flops=2 * N * C * H * W * K * K,
        transcendentals=N * C * H * W,
        bytes_accessed=Hp * SCR_W * 4 + H * ACC_W * 4,
    )

    conv_call = pl.pallas_call(
        kernel,
        out_shape=jax.ShapeDtypeStruct((H, ACC_W), jnp.float32),
        grid_spec=pltpu.PrefetchScalarGridSpec(
            num_scalar_prefetch=0,
            grid=(1,),                                # whole problem in one step
            in_specs=[pl.BlockSpec((Hp, SCR_W), lambda i: (0, 0))],
            out_specs=pl.BlockSpec((H, ACC_W), lambda i: (0, 0)),
        ),
        compiler_params=pltpu.CompilerParams(
            dimension_semantics=("arbitrary",)),
        cost_estimate=cost,
    )

    @jax.jit
    def run(x):
        assert x.shape == (N, C, H, W)
        # ---- wrapper-side layout plumbing (all padding folded into one repack) ----
        # xpk[r, (n*C + c)*SP + q] = x_padded[n, c, r, q]; all other lanes are zero.
        xpk = jnp.pad(x, ((0, 0), (0, 0), (p, p), (p, SP - S + p)))     # (N,C,Hp,SP)
        xpk = jnp.transpose(xpk, (2, 0, 1, 3)).reshape(Hp, NS * SP)     # (Hp, NS*SP)
        xpk = jnp.pad(xpk, ((0, 0), (0, SCR_W - NS * SP)))              # (Hp, SCR_W)
        out_raw = conv_call(xpk)                                        # (H, ACC_W)
        # Unpack: drop q >= W garbage columns, restore NCHW (free layout plumbing).
        out = out_raw.reshape(H, N, C, SP)[:, :, :, :W]
        return jnp.transpose(out, (1, 2, 0, 3))                         # (N,C,H,W)

    return run


def preprocess_ref(x: jnp.ndarray, filt: jnp.ndarray) -> jnp.ndarray:
    """Pure-JAX reference: depthwise conv (groups=C) + tanh(2*pi*.)."""
    C, K, _ = filt.shape
    w = filt.reshape(C, 1, K, K)                     # (out=C, in/group=1, K, K)
    y = jax.lax.conv_general_dilated(
        x, w, window_strides=(1, 1), padding="SAME",
        feature_group_count=C,
        dimension_numbers=("NCHW", "OIHW", "NCHW"))
    return jnp.tanh(2.0 * math.pi * y)


if __name__ == "__main__":
    sig = 1.0
    channels = 4
    N, H, W = 2, 16, 16

    log2d = log_filter_np(sig)                                   # (7, 7) numpy
    fn = build_preprocess(log2d, N, channels, H, W)

    key = jax.random.PRNGKey(0)
    x = jax.random.normal(key, (N, channels, H, W), dtype=jnp.float32)

    out = jax.block_until_ready(fn(x))

    filt = jnp.broadcast_to(jnp.asarray(log2d), (channels,) + log2d.shape)
    ref = preprocess_ref(x, filt)
    np.testing.assert_allclose(np.asarray(out), np.asarray(ref), rtol=1e-5, atol=2e-5)

    print("KERNEL_OK")
</pallas_src>

<mosaic_0001>
module attributes {stable_mosaic.version = 11 : i64} {
  func.func @kernel(%arg0: i32, %arg1: memref<22x384xf32, #tpu.memory_space<vmem>>, %arg2: memref<16x256xf32, #tpu.memory_space<vmem>>) attributes {dimension_semantics = [#tpu.dimension_semantics<arbitrary>], iteration_bounds = array<i64: 1>, scalar_prefetch = 0 : i64, scratch_operands = 0 : i64, tpu.core_type = #tpu.core_type<tc>, window_params = [{pipeline_mode = #tpu.pipeline_mode<synchronous>, transform_indices = @transform_0, window_bounds = array<i64: 22, 384>}, {pipeline_mode = #tpu.pipeline_mode<synchronous>, transform_indices = @transform_1, window_bounds = array<i64: 16, 256>}]} {
    %cst = arith.constant 0.000000e+00 : f32
    %0 = vector.broadcast %cst : f32 to vector<16x256xf32>
    %cst_0 = arith.constant 0.000000e+00 : f32
    %1 = vector.broadcast %cst_0 : f32 to vector<16x256xf32>
    %cst_1 = arith.constant 0.000000e+00 : f32
    %2 = vector.broadcast %cst_1 : f32 to vector<16x256xf32>
    %cst_2 = arith.constant 0.000000e+00 : f32
    %3 = vector.broadcast %cst_2 : f32 to vector<16x256xf32>
    %c0 = arith.constant 0 : index
    %c0_3 = arith.constant 0 : index
    %4 = vector.load %arg1[%c0, %c0_3] : memref<22x384xf32, #tpu.memory_space<vmem>>, vector<16x384xf32>
    %5 = vector.extract_strided_slice %4 {offsets = [0, 0], sizes = [16, 256], strides = [1, 1]} : vector<16x384xf32> to vector<16x256xf32>
    %cst_4 = arith.constant 0.00197455683 : f32
    %6 = vector.broadcast %cst_4 : f32 to vector<16x256xf32>
    %7 = arith.mulf %6, %5 : vector<16x256xf32>
    %8 = arith.addf %0, %7 : vector<16x256xf32>
    %9 = vector.extract_strided_slice %4 {offsets = [0, 1], sizes = [16, 256], strides = [1, 1]} : vector<16x384xf32> to vector<16x256xf32>
    %cst_5 = arith.constant 0.0165378321 : f32
    %10 = vector.broadcast %cst_5 : f32 to vector<16x256xf32>
    %11 = arith.mulf %10, %9 : vector<16x256xf32>
    %12 = arith.addf %1, %11 : vector<16x256xf32>
    %13 = vector.extract_strided_slice %4 {offsets = [0, 2], sizes = [16, 256], strides = [1, 1]} : vector<16x384xf32> to vector<16x256xf32>
    %cst_6 = arith.constant 0.053903576 : f32
    %14 = vector.broadcast %cst_6 : f32 to vector<16x256xf32>
    %15 = arith.mulf %14, %13 : vector<16x256xf32>
    %16 = arith.addf %2, %15 : vector<16x256xf32>
    %17 = vector.extract_strided_slice %4 {offsets = [0, 3], sizes = [16, 256], strides = [1, 1]} : vector<16x384xf32> to vector<16x256xf32>
    %cst_7 = arith.constant 0.0777629763 : f32
    %18 = vector.broadcast %cst_7 : f32 to vector<16x256xf32>
    %19 = arith.mulf %18, %17 : vector<16x256xf32>
    %20 = arith.addf %3, %19 : vector<16x256xf32>
    %21 = vector.extract_strided_slice %4 {offsets = [0, 4], sizes = [16, 256], strides = [1, 1]} : vector<16x384xf32> to vector<16x256xf32>
    %cst_8 = arith.constant 0.053903576 : f32
    %22 = vector.broadcast %cst_8 : f32 to vector<16x256xf32>
    %23 = arith.mulf %22, %21 : vector<16x256xf32>
    %24 = arith.addf %8, %23 : vector<16x256xf32>
    %25 = vector.extract_strided_slice %4 {offsets = [0, 5], sizes = [16, 256], strides = [1, 1]} : vector<16x384xf32> to vector<16x256xf32>
    %cst_9 = arith.constant 0.0165378321 : f32
    %26 = vector.broadcast %cst_9 : f32 to vector<16x256xf32>
    %27 = arith.mulf %26, %25 : vector<16x256xf32>
    %28 = arith.addf %12, %27 : vector<16x256xf32>
    %29 = vector.extract_strided_slice %4 {offsets = [0, 6], sizes = [16, 256], strides = [1, 1]} : vector<16x384xf32> to vector<16x256xf32>
    %cst_10 = arith.constant 0.00197455683 : f32
    %30 = vector.broadcast %cst_10 : f32 to vector<16x256xf32>
    %31 = arith.mulf %30, %29 : vector<16x256xf32>
    %32 = arith.addf %16, %31 : vector<16x256xf32>
    %c1 = arith.constant 1 : index
    %c0_11 = arith.constant 0 : index
    %33 = vector.load %arg1[%c1, %c0_11] : memref<22x384xf32, #tpu.memory_space<vmem>>, vector<16x384xf32>
    %34 = vector.extract_strided_slice %33 {offsets = [0, 0], sizes = [16, 256], strides = [1, 1]} : vector<16x384xf32> to vector<16x256xf32>
    %cst_12 = arith.constant 0.0165378321 : f32
    %35 = vector.broadcast %cst_12 : f32 to vector<16x256xf32>
    %36 = arith.mulf %35, %34 : vector<16x256xf32>
    %37 = arith.addf %20, %36 : vector<16x256xf32>
    %38 = vector.extract_strided_slice %33 {offsets = [0, 1], sizes = [16, 256], strides = [1, 1]} : vector<16x384xf32> to vector<16x256xf32>
    %cst_13 = arith.constant 0.109893836 : f32
    %39 = vector.broadcast %cst_13 : f32 to vector<16x256xf32>
    %40 = arith.mulf %39, %38 : vector<16x256xf32>
    %41 = arith.addf %24, %40 : vector<16x256xf32>
    %42 = vector.extract_strided_slice %33 {offsets = [0, 2], sizes = [16, 256], strides = [1, 1]} : vector<16x384xf32> to vector<16x256xf32>
    %cst_14 = arith.constant 2.462550e-01 : f32
    %43 = vector.broadcast %cst_14 : f32 to vector<16x256xf32>
    %44 = arith.mulf %43, %42 : vector<16x256xf32>
    %45 = arith.addf %28, %44 : vector<16x256xf32>
    %46 = vector.extract_strided_slice %33 {offsets = [0, 3], sizes = [16, 256], strides = [1, 1]} : vector<16x384xf32> to vector<16x256xf32>
    %cst_15 = arith.constant 0.270670593 : f32
    %47 = vector.broadcast %cst_15 : f32 to vector<16x256xf32>
    %48 = arith.mulf %47, %46 : vector<16x256xf32>
    %49 = arith.addf %32, %48 : vector<16x256xf32>
    %50 = vector.extract_strided_slice %33 {offsets = [0, 4], sizes = [16, 256], strides = [1, 1]} : vector<16x384xf32> to vector<16x256xf32>
    %cst_16 = arith.constant 2.462550e-01 : f32
    %51 = vector.broadcast %cst_16 : f32 to vector<16x256xf32>
    %52 = arith.mulf %51, %50 : vector<16x256xf32>
    %53 = arith.addf %37, %52 : vector<16x256xf32>
    %54 = vector.extract_strided_slice %33 {offsets = [0, 5], sizes = [16, 256], strides = [1, 1]} : vector<16x384xf32> to vector<16x256xf32>
    %cst_17 = arith.constant 0.109893836 : f32
    %55 = vector.broadcast %cst_17 : f32 to vector<16x256xf32>
    %56 = arith.mulf %55, %54 : vector<16x256xf32>
    %57 = arith.addf %41, %56 : vector<16x256xf32>
    %58 = vector.extract_strided_slice %33 {offsets = [0, 6], sizes = [16, 256], strides = [1, 1]} : vector<16x384xf32> to vector<16x256xf32>
    %cst_18 = arith.constant 0.0165378321 : f32
    %59 = vector.broadcast %cst_18 : f32 to vector<16x256xf32>
    %60 = arith.mulf %59, %58 : vector<16x256xf32>
    %61 = arith.addf %45, %60 : vector<16x256xf32>
    %c2 = arith.constant 2 : index
    %c0_19 = arith.constant 0 : index
    %62 = vector.load %arg1[%c2, %c0_19] : memref<22x384xf32, #tpu.memory_space<vmem>>, vector<16x384xf32>
    %63 = vector.extract_strided_slice %62 {offsets = [0, 0], sizes = [16, 256], strides = [1, 1]} : vector<16x384xf32> to vector<16x256xf32>
    %cst_20 = arith.constant 0.053903576 : f32
    %64 = vector.broadcast %cst_20 : f32 to vector<16x256xf32>
    %65 = arith.mulf %64, %63 : vector<16x256xf32>
    %66 = arith.addf %49, %65 : vector<16x256xf32>
    %67 = vector.extract_strided_slice %62 {offsets = [0, 1], sizes = [16, 256], strides = [1, 1]} : vector<16x384xf32> to vector<16x256xf32>
    %cst_21 = arith.constant 2.462550e-01 : f32
    %68 = vector.broadcast %cst_21 : f32 to vector<16x256xf32>
    %69 = arith.mulf %68, %67 : vector<16x256xf32>
    %70 = arith.addf %53, %69 : vector<16x256xf32>
    %71 = vector.extract_strided_slice %62 {offsets = [0, 2], sizes = [16, 256], strides = [1, 1]} : vector<16x384xf32> to vector<16x256xf32>
    %cst_22 = arith.constant -0.000000e+00 : f32
    %72 = vector.broadcast %cst_22 : f32 to vector<16x256xf32>
    %73 = arith.mulf %72, %71 : vector<16x256xf32>
    %74 = arith.addf %57, %73 : vector<16x256xf32>
    %75 = vector.extract_strided_slice %62 {offsets = [0, 3], sizes = [16, 256], strides = [1, 1]} : vector<16x384xf32> to vector<16x256xf32>
    %cst_23 = arith.constant -0.606530666 : f32
    %76 = vector.broadcast %cst_23 : f32 to vector<16x256xf32>
    %77 = arith.mulf %76, %75 : vector<16x256xf32>
    %78 = arith.addf %61, %77 : vector<16x256xf32>
    %79 = vector.extract_strided_slice %62 {offsets = [0, 4], sizes = [16, 256], strides = [1, 1]} : vector<16x384xf32> to vector<16x256xf32>
    %cst_24 = arith.constant -0.000000e+00 : f32
    %80 = vector.broadcast %cst_24 : f32 to vector<16x256xf32>
    %81 = arith.mulf %80, %79 : vector<16x256xf32>
    %82 = arith.addf %66, %81 : vector<16x256xf32>
    %83 = vector.extract_strided_slice %62 {offsets = [0, 5], sizes = [16, 256], strides = [1, 1]} : vector<16x384xf32> to vector<16x256xf32>
    %cst_25 = arith.constant 2.462550e-01 : f32
    %84 = vector.broadcast %cst_25 : f32 to vector<16x256xf32>
    %85 = arith.mulf %84, %83 : vector<16x256xf32>
    %86 = arith.addf %70, %85 : vector<16x256xf32>
    %87 = vector.extract_strided_slice %62 {offsets = [0, 6], sizes = [16, 256], strides = [1, 1]} : vector<16x384xf32> to vector<16x256xf32>
    %cst_26 = arith.constant 0.053903576 : f32
    %88 = vector.broadcast %cst_26 : f32 to vector<16x256xf32>
    %89 = arith.mulf %88, %87 : vector<16x256xf32>
    %90 = arith.addf %74, %89 : vector<16x256xf32>
    %c3 = arith.constant 3 : index
    %c0_27 = arith.constant 0 : index
    %91 = vector.load %arg1[%c3, %c0_27] : memref<22x384xf32, #tpu.memory_space<vmem>>, vector<16x384xf32>
    %92 = vector.extract_strided_slice %91 {offsets = [0, 0], sizes = [16, 256], strides = [1, 1]} : vector<16x384xf32> to vector<16x256xf32>
    %cst_28 = arith.constant 0.0777629763 : f32
    %93 = vector.broadcast %cst_28 : f32 to vector<16x256xf32>
    %94 = arith.mulf %93, %92 : vector<16x256xf32>
    %95 = arith.addf %78, %94 : vector<16x256xf32>
    %96 = vector.extract_strided_slice %91 {offsets = [0, 1], sizes = [16, 256], strides = [1, 1]} : vector<16x384xf32> to vector<16x256xf32>
    %cst_29 = arith.constant 0.270670593 : f32
    %97 = vector.broadcast %cst_29 : f32 to vector<16x256xf32>
    %98 = arith.mulf %97, %96 : vector<16x256xf32>
    %99 = arith.addf %82, %98 : vector<16x256xf32>
    %100 = vector.extract_strided_slice %91 {offsets = [0, 2], sizes = [16, 256], strides = [1, 1]} : vector<16x384xf32> to vector<16x256xf32>
    %cst_30 = arith.constant -0.606530666 : f32
    %101 = vector.broadcast %cst_30 : f32 to vector<16x256xf32>
    %102 = arith.mulf %101, %100 : vector<16x256xf32>
    %103 = arith.addf %86, %102 : vector<16x256xf32>
    %104 = vector.extract_strided_slice %91 {offsets = [0, 3], sizes = [16, 256], strides = [1, 1]} : vector<16x384xf32> to vector<16x256xf32>
    %cst_31 = arith.constant -2.000000e+00 : f32
    %105 = vector.broadcast %cst_31 : f32 to vector<16x256xf32>
    %106 = arith.mulf %105, %104 : vector<16x256xf32>
    %107 = arith.addf %90, %106 : vector<16x256xf32>
    %108 = vector.extract_strided_slice %91 {offsets = [0, 4], sizes = [16, 256], strides = [1, 1]} : vector<16x384xf32> to vector<16x256xf32>
    %cst_32 = arith.constant -0.606530666 : f32
    %109 = vector.broadcast %cst_32 : f32 to vector<16x256xf32>
    %110 = arith.mulf %109, %108 : vector<16x256xf32>
    %111 = arith.addf %95, %110 : vector<16x256xf32>
    %112 = vector.extract_strided_slice %91 {offsets = [0, 5], sizes = [16, 256], strides = [1, 1]} : vector<16x384xf32> to vector<16x256xf32>
    %cst_33 = arith.constant 0.270670593 : f32
    %113 = vector.broadcast %cst_33 : f32 to vector<16x256xf32>
    %114 = arith.mulf %113, %112 : vector<16x256xf32>
    %115 = arith.addf %99, %114 : vector<16x256xf32>
    %116 = vector.extract_strided_slice %91 {offsets = [0, 6], sizes = [16, 256], strides = [1, 1]} : vector<16x384xf32> to vector<16x256xf32>
    %cst_34 = arith.constant 0.0777629763 : f32
    %117 = vector.broadcast %cst_34 : f32 to vector<16x256xf32>
    %118 = arith.mulf %117, %116 : vector<16x256xf32>
    %119 = arith.addf %103, %118 : vector<16x256xf32>
    %c4 = arith.constant 4 : index
    %c0_35 = arith.constant 0 : index
    %120 = vector.load %arg1[%c4, %c0_35] : memref<22x384xf32, #tpu.memory_space<vmem>>, vector<16x384xf32>
    %121 = vector.extract_strided_slice %120 {offsets = [0, 0], sizes = [16, 256], strides = [1, 1]} : vector<16x384xf32> to vector<16x256xf32>
    %cst_36 = arith.constant 0.053903576 : f32
    %122 = vector.broadcast %cst_36 : f32 to vector<16x256xf32>
    %123 = arith.mulf %122, %121 : vector<16x256xf32>
    %124 = arith.addf %107, %123 : vector<16x256xf32>
    %125 = vector.extract_strided_slice %120 {offsets = [0, 1], sizes = [16, 256], strides = [1, 1]} : vector<16x384xf32> to vector<16x256xf32>
    %cst_37 = arith.constant 2.462550e-01 : f32
    %126 = vector.broadcast %cst_37 : f32 to vector<16x256xf32>
    %127 = arith.mulf %126, %125 : vector<16x256xf32>
    %128 = arith.addf %111, %127 : vector<16x256xf32>
    %129 = vector.extract_strided_slice %120 {offsets = [0, 2], sizes = [16, 256], strides = [1, 1]} : vector<16x384xf32> to vector<16x256xf32>
    %cst_38 = arith.constant -0.000000e+00 : f32
    %130 = vector.broadcast %cst_38 : f32 to vector<16x256xf32>
    %131 = arith.mulf %130, %129 : vector<16x256xf32>
    %132 = arith.addf %115, %131 : vector<16x256xf32>
    %133 = vector.extract_strided_slice %120 {offsets = [0, 3], sizes = [16, 256], strides = [1, 1]} : vector<16x384xf32> to vector<16x256xf32>
    %cst_39 = arith.constant -0.606530666 : f32
    %134 = vector.broadcast %cst_39 : f32 to vector<16x256xf32>
    %135 = arith.mulf %134, %133 : vector<16x256xf32>
    %136 = arith.addf %119, %135 : vector<16x256xf32>
    %137 = vector.extract_strided_slice %120 {offsets = [0, 4], sizes = [16, 256], strides = [1, 1]} : vector<16x384xf32> to vector<16x256xf32>
    %cst_40 = arith.constant -0.000000e+00 : f32
    %138 = vector.broadcast %cst_40 : f32 to vector<16x256xf32>
    %139 = arith.mulf %138, %137 : vector<16x256xf32>
    %140 = arith.addf %124, %139 : vector<16x256xf32>
    %141 = vector.extract_strided_slice %120 {offsets = [0, 5], sizes = [16, 256], strides = [1, 1]} : vector<16x384xf32> to vector<16x256xf32>
    %cst_41 = arith.constant 2.462550e-01 : f32
    %142 = vector.broadcast %cst_41 : f32 to vector<16x256xf32>
    %143 = arith.mulf %142, %141 : vector<16x256xf32>
    %144 = arith.addf %128, %143 : vector<16x256xf32>
    %145 = vector.extract_strided_slice %120 {offsets = [0, 6], sizes = [16, 256], strides = [1, 1]} : vector<16x384xf32> to vector<16x256xf32>
    %cst_42 = arith.constant 0.053903576 : f32
    %146 = vector.broadcast %cst_42 : f32 to vector<16x256xf32>
    %147 = arith.mulf %146, %145 : vector<16x256xf32>
    %148 = arith.addf %132, %147 : vector<16x256xf32>
    %c5 = arith.constant 5 : index
    %c0_43 = arith.constant 0 : index
    %149 = vector.load %arg1[%c5, %c0_43] : memref<22x384xf32, #tpu.memory_space<vmem>>, vector<16x384xf32>
    %150 = vector.extract_strided_slice %149 {offsets = [0, 0], sizes = [16, 256], strides = [1, 1]} : vector<16x384xf32> to vector<16x256xf32>
    %cst_44 = arith.constant 0.0165378321 : f32
    %151 = vector.broadcast %cst_44 : f32 to vector<16x256xf32>
    %152 = arith.mulf %151, %150 : vector<16x256xf32>
    %153 = arith.addf %136, %152 : vector<16x256xf32>
    %154 = vector.extract_strided_slice %149 {offsets = [0, 1], sizes = [16, 256], strides = [1, 1]} : vector<16x384xf32> to vector<16x256xf32>
    %cst_45 = arith.constant 0.109893836 : f32
    %155 = vector.broadcast %cst_45 : f32 to vector<16x256xf32>
    %156 = arith.mulf %155, %154 : vector<16x256xf32>
    %157 = arith.addf %140, %156 : vector<16x256xf32>
    %158 = vector.extract_strided_slice %149 {offsets = [0, 2], sizes = [16, 256], strides = [1, 1]} : vector<16x384xf32> to vector<16x256xf32>
    %cst_46 = arith.constant 2.462550e-01 : f32
    %159 = vector.broadcast %cst_46 : f32 to vector<16x256xf32>
    %160 = arith.mulf %159, %158 : vector<16x256xf32>
    %161 = arith.addf %144, %160 : vector<16x256xf32>
    %162 = vector.extract_strided_slice %149 {offsets = [0, 3], sizes = [16, 256], strides = [1, 1]} : vector<16x384xf32> to vector<16x256xf32>
    %cst_47 = arith.constant 0.270670593 : f32
    %163 = vector.broadcast %cst_47 : f32 to vector<16x256xf32>
    %164 = arith.mulf %163, %162 : vector<16x256xf32>
    %165 = arith.addf %148, %164 : vector<16x256xf32>
    %166 = vector.extract_strided_slice %149 {offsets = [0, 4], sizes = [16, 256], strides = [1, 1]} : vector<16x384xf32> to vector<16x256xf32>
    %cst_48 = arith.constant 2.462550e-01 : f32
    %167 = vector.broadcast %cst_48 : f32 to vector<16x256xf32>
    %168 = arith.mulf %167, %166 : vector<16x256xf32>
    %169 = arith.addf %153, %168 : vector<16x256xf32>
    %170 = vector.extract_strided_slice %149 {offsets = [0, 5], sizes = [16, 256], strides = [1, 1]} : vector<16x384xf32> to vector<16x256xf32>
    %cst_49 = arith.constant 0.109893836 : f32
    %171 = vector.broadcast %cst_49 : f32 to vector<16x256xf32>
    %172 = arith.mulf %171, %170 : vector<16x256xf32>
    %173 = arith.addf %157, %172 : vector<16x256xf32>
    %174 = vector.extract_strided_slice %149 {offsets = [0, 6], sizes = [16, 256], strides = [1, 1]} : vector<16x384xf32> to vector<16x256xf32>
    %cst_50 = arith.constant 0.0165378321 : f32
    %175 = vector.broadcast %cst_50 : f32 to vector<16x256xf32>
    %176 = arith.mulf %175, %174 : vector<16x256xf32>
    %177 = arith.addf %161, %176 : vector<16x256xf32>
    %c6 = arith.constant 6 : index
    %c0_51 = arith.constant 0 : index
    %178 = vector.load %arg1[%c6, %c0_51] : memref<22x384xf32, #tpu.memory_space<vmem>>, vector<16x384xf32>
    %179 = vector.extract_strided_slice %178 {offsets = [0, 0], sizes = [16, 256], strides = [1, 1]} : vector<16x384xf32> to vector<16x256xf32>
    %cst_52 = arith.constant 0.00197455683 : f32
    %180 = vector.broadcast %cst_52 : f32 to vector<16x256xf32>
    %181 = arith.mulf %180, %179 : vector<16x256xf32>
    %182 = arith.addf %165, %181 : vector<16x256xf32>
    %183 = vector.extract_strided_slice %178 {offsets = [0, 1], sizes = [16, 256], strides = [1, 1]} : vector<16x384xf32> to vector<16x256xf32>
    %cst_53 = arith.constant 0.0165378321 : f32
    %184 = vector.broadcast %cst_53 : f32 to vector<16x256xf32>
    %185 = arith.mulf %184, %183 : vector<16x256xf32>
    %186 = arith.addf %169, %185 : vector<16x256xf32>
    %187 = vector.extract_strided_slice %178 {offsets = [0, 2], sizes = [16, 256], strides = [1, 1]} : vector<16x384xf32> to vector<16x256xf32>
    %cst_54 = arith.constant 0.053903576 : f32
    %188 = vector.broadcast %cst_54 : f32 to vector<16x256xf32>
    %189 = arith.mulf %188, %187 : vector<16x256xf32>
    %190 = arith.addf %173, %189 : vector<16x256xf32>
    %191 = vector.extract_strided_slice %178 {offsets = [0, 3], sizes = [16, 256], strides = [1, 1]} : vector<16x384xf32> to vector<16x256xf32>
    %cst_55 = arith.constant 0.0777629763 : f32
    %192 = vector.broadcast %cst_55 : f32 to vector<16x256xf32>
    %193 = arith.mulf %192, %191 : vector<16x256xf32>
    %194 = arith.addf %177, %193 : vector<16x256xf32>
    %195 = vector.extract_strided_slice %178 {offsets = [0, 4], sizes = [16, 256], strides = [1, 1]} : vector<16x384xf32> to vector<16x256xf32>
    %cst_56 = arith.constant 0.053903576 : f32
    %196 = vector.broadcast %cst_56 : f32 to vector<16x256xf32>
    %197 = arith.mulf %196, %195 : vector<16x256xf32>
    %198 = arith.addf %182, %197 : vector<16x256xf32>
    %199 = vector.extract_strided_slice %178 {offsets = [0, 5], sizes = [16, 256], strides = [1, 1]} : vector<16x384xf32> to vector<16x256xf32>
    %cst_57 = arith.constant 0.0165378321 : f32
    %200 = vector.broadcast %cst_57 : f32 to vector<16x256xf32>
    %201 = arith.mulf %200, %199 : vector<16x256xf32>
    %202 = arith.addf %186, %201 : vector<16x256xf32>
    %203 = vector.extract_strided_slice %178 {offsets = [0, 6], sizes = [16, 256], strides = [1, 1]} : vector<16x384xf32> to vector<16x256xf32>
    %cst_58 = arith.constant 0.00197455683 : f32
    %204 = vector.broadcast %cst_58 : f32 to vector<16x256xf32>
    %205 = arith.mulf %204, %203 : vector<16x256xf32>
    %206 = arith.addf %190, %205 : vector<16x256xf32>
    %207 = arith.addf %206, %194 : vector<16x256xf32>
    %208 = arith.addf %198, %202 : vector<16x256xf32>
    %209 = arith.addf %207, %208 : vector<16x256xf32>
    %210 = math.tanh %209 : vector<16x256xf32>
    %c0_59 = arith.constant 0 : index
    %c0_60 = arith.constant 0 : index
    %211 = vector.load %arg2[%c0_59, %c0_60] : memref<16x256xf32, #tpu.memory_space<vmem>>, vector<16x256xf32>
    tpu.vector_store %arg2[%c0_59, %c0_60], %210 {strides = array<i32>} : memref<16x256xf32, #tpu.memory_space<vmem>>, vector<16x256xf32>,
    return
  }
  func.func @transform_0(%arg0: i32) -> (i32, i32) {
    %c0_i32 = arith.constant 0 : i32
    %c0_i32_0 = arith.constant 0 : i32
    %c0_i32_1 = arith.constant 0 : i32
    return %c0_i32, %c0_i32_0 : i32, i32
  }
  func.func @transform_1(%arg0: i32) -> (i32, i32) {
    %c0_i32 = arith.constant 0 : i32
    %c0_i32_0 = arith.constant 0 : i32
    %c0_i32_1 = arith.constant 0 : i32
    return %c0_i32, %c0_i32_0 : i32, i32
  }
}

</mosaic_0001>

<llo_original>
// kernel: run.1
$region0: #{run.1}
  #allocation0 [shape = 'u32[]', space=smem, size = 0x4, offset = 0x4, fixed_abs, tag = 'smem constant byte address 0x4 - core index']
  #allocation1 [shape = 'u32[72,128]{1,0:T(1,128)}', space=vmem, size = 0x9000, scoped, tag = 'internal scratch']
  %s0 = inlined_call_operand.vmem [shape: f32[22,384], index: 0, kind: input, shape index: {}]
  %s1 = inlined_call_operand.vmem [shape: f32[16,256], index: 1, kind: output, shape index: {}]
  %s2 = sld [smem:[#allocation0]]
  $region14: #{run.1} parent=0
    _
  %s4 = ssub.s32 1, %s2
  %s5 = scalar_select 0, %s4, %s2
  // Predicated region
  $region2: #{run.1} parent=0 // pred_check
    _
  $region3: #{run.1} parent=0 // pred_check_branch
    %7 = sbr.rel (0) target = $region5
  $region4: #{run.1} parent=0 // pred_region
    _
  $region5: #{run.1} parent=0 // pred_fallthru
    _
  %v8 = vld [vmem:[%s0] sm:$0xff]
  %v9 = vld [vmem:[%s0 + $0x8] sm:$0xff]
  %v10 = vld [vmem:[%s0 + $0x10] sm:$0xff]
  %v11 = vld [vmem:[%s0 + $0x18] sm:$0xff]
  %v12 = vld [vmem:[%s0 + $0x20] sm:$0xff]
  %v13 = vld [vmem:[%s0 + $0x28] sm:$0xff]
  %v14 = vmul.f32 %v8, 0.0019745568
  %v15 = vmul.f32 %v9, 0.0019745568
  %v16 = vmul.f32 %v11, 0.0019745568
  %v17 = vmul.f32 %v12, 0.0019745568
  %v18 = vadd.f32 %v14, 0.0
  %v19 = vadd.f32 %v15, 0.0
  %v20 = vadd.f32 %v16, 0.0
  %v21 = vadd.f32 %v17, 0.0
  %v22 = vmul.f32 %v8, 0.016537832
  %v23 = vmul.f32 %v9, 0.016537832
  %v24 = vmul.f32 %v10, 0.016537832
  %v25 = vmul.f32 %v11, 0.016537832
  %v26 = vmul.f32 %v12, 0.016537832
  %v27 = vmul.f32 %v13, 0.016537832
  %v28 = vadd.f32 %v22, 0.0
  %v29 = vadd.f32 %v23, 0.0
  %v30 = vadd.f32 %v24, 0.0
  %v31 = vadd.f32 %v25, 0.0
  %v32 = vadd.f32 %v26, 0.0
  %v33 = vadd.f32 %v27, 0.0
  %v34 = vmul.f32 %v8, 0.053903576
  %v35 = vmul.f32 %v9, 0.053903576
  %v36 = vmul.f32 %v10, 0.053903576
  %v37 = vmul.f32 %v11, 0.053903576
  %v38 = vmul.f32 %v12, 0.053903576
  %v39 = vmul.f32 %v13, 0.053903576
  %v40 = vadd.f32 %v34, 0.0
  %v41 = vadd.f32 %v35, 0.0
  %v42 = vadd.f32 %v36, 0.0
  %v43 = vadd.f32 %v37, 0.0
  %v44 = vadd.f32 %v38, 0.0
  %v45 = vadd.f32 %v39, 0.0
  %v46 = vmul.f32 %v8, 0.07776298
  %v47 = vmul.f32 %v9, 0.07776298
  %v48 = vmul.f32 %v10, 0.07776298
  %v49 = vmul.f32 %v11, 0.07776298
  %v50 = vmul.f32 %v12, 0.07776298
  %v51 = vmul.f32 %v13, 0.07776298
  %v52 = vadd.f32 %v46, 0.0
  %v53 = vadd.f32 %v47, 0.0
  %v54 = vadd.f32 %v48, 0.0
  %v55 = vadd.f32 %v49, 0.0
  %v56 = vadd.f32 %v50, 0.0
  %v57 = vadd.f32 %v51, 0.0
  %64 = vrot.lane.b32.xlu0 %v34, 124
  %v65 = vpop.permute.xlu0 %64
  %66 = vrot.lane.b32.xlu0 %v35, 124
  %v67 = vpop.permute.xlu0 %66
  %68 = vrot.lane.b32.xlu0 %v36, 124
  %v69 = vpop.permute.xlu0 %68
  %70 = vrot.lane.b32.xlu0 %v37, 124
  %v71 = vpop.permute.xlu0 %70
  %72 = vrot.lane.b32.xlu0 %v38, 124
  %v73 = vpop.permute.xlu0 %72
  %74 = vrot.lane.b32.xlu0 %v39, 124
  %v75 = vpop.permute.xlu0 %74
  %vm76 = vcmask 1014784
  %v77 = vsel %vm76, %v65, %v67
  %v78 = vsel %vm76, %v67, %v69
  %v79 = vsel %vm76, %v71, %v73
  %v80 = vsel %vm76, %v73, %v75
  %v85 = vadd.f32 %v18, %v77
  %v86 = vadd.f32 %v19, %v78
  %v87 = vadd.f32 %v20, %v79
  %v88 = vadd.f32 %v21, %v80
  %95 = vrot.lane.b32.xlu0 %v22, 124
  %v96 = vpop.permute.xlu0 %95
  %97 = vrot.lane.b32.xlu0 %v23, 124
  %v98 = vpop.permute.xlu0 %97
  %99 = vrot.lane.b32.xlu0 %v24, 124
  %v100 = vpop.permute.xlu0 %99
  %101 = vrot.lane.b32.xlu0 %v25, 124
  %v102 = vpop.permute.xlu0 %101
  %103 = vrot.lane.b32.xlu0 %v26, 124
  %v104 = vpop.permute.xlu0 %103
  %105 = vrot.lane.b32.xlu0 %v27, 124
  %v106 = vpop.permute.xlu0 %105
  %v107 = vsel %vm76, %v96, %v98
  %v108 = vsel %vm76, %v98, %v100
  %v109 = vsel %vm76, %v102, %v104
  %v110 = vsel %vm76, %v104, %v106
  %v117 = vadd.f32 %v28, %v107
  %v118 = vadd.f32 %v29, %v108
  %v119 = vadd.f32 %v30, %v100
  %v120 = vadd.f32 %v31, %v109
  %v121 = vadd.f32 %v32, %v110
  %v122 = vadd.f32 %v33, %v106
  %v123 = vmul.f32 %v10, 0.0019745568
  %v124 = vmul.f32 %v13, 0.0019745568
  %131 = vrot.lane.b32.xlu0 %v14, 124
  %v132 = vpop.permute.xlu0 %131
  %133 = vrot.lane.b32.xlu0 %v15, 124
  %v134 = vpop.permute.xlu0 %133
  %135 = vrot.lane.b32.xlu0 %v123, 124
  %v136 = vpop.permute.xlu0 %135
  %137 = vrot.lane.b32.xlu0 %v16, 124
  %v138 = vpop.permute.xlu0 %137
  %139 = vrot.lane.b32.xlu0 %v17, 124
  %v140 = vpop.permute.xlu0 %139
  %141 = vrot.lane.b32.xlu0 %v124, 124
  %v142 = vpop.permute.xlu0 %141
  %v143 = vsel %vm76, %v132, %v134
  %v144 = vsel %vm76, %v134, %v136
  %v145 = vsel %vm76, %v138, %v140
  %v146 = vsel %vm76, %v140, %v142
  %v153 = vadd.f32 %v40, %v143
  %v154 = vadd.f32 %v41, %v144
  %v155 = vadd.f32 %v42, %v136
  %v156 = vadd.f32 %v43, %v145
  %v157 = vadd.f32 %v44, %v146
  %v158 = vadd.f32 %v45, %v142
  %v159 = vld [vmem:[%s0] sm:$0xfe]
  %v160 = vld [vmem:[%s0 + $0x8] sm:$0xfe]
  %v161 = vld [vmem:[%s0 + $0x10] sm:$0xfe]
  %v162 = vld [vmem:[%s0 + $0x30] sm:$0x1]
  %v163 = vld [vmem:[%s0 + $0x38] sm:$0x1]
  %v164 = vld [vmem:[%s0 + $0x40] sm:$0x1]
  %v165 = vmul.f32 %v159, 0.016537832
  %v166 = vmul.f32 %v160, 0.016537832
  %v167 = vmul.f32 %v162, 0.016537832
  %v168 = vmul.f32 %v163, 0.016537832
  %vm173 = vcmask 1046528
  %v174 = vrot.slane %v165, 1
  %v175 = vrot.slane %v25, 1
  %v176 = vsel %vm173, %v174, %v175
  %v177 = vrot.slane %v166, 1
  %v178 = vrot.slane %v26, 1
  %v179 = vsel %vm173, %v177, %v178
  %v180 = vrot.slane %v167, 1
  %v181 = vsel %vm173, %v175, %v180
  %v182 = vrot.slane %v168, 1
  %v183 = vsel %vm173, %v178, %v182
  %184 = vrot.lane.b32.xlu0 %v176, 3
  %v185 = vpop.permute.xlu0 %184
  %186 = vrot.lane.b32.xlu0 %v179, 3
  %v187 = vpop.permute.xlu0 %186
  %188 = vrot.lane.b32.xlu0 %v181, 3
  %v189 = vpop.permute.xlu0 %188
  %190 = vrot.lane.b32.xlu0 %v183, 3
  %v191 = vpop.permute.xlu0 %190
  %vm192 = vcmask 23552
  %v193 = vsel %vm192, %v185, %v187
  %v194 = vsel %vm192, %v189, %v191
  %v201 = vadd.f32 %v52, %v185
  %v202 = vadd.f32 %v53, %v193
  %v203 = vadd.f32 %v54, %v187
  %v204 = vadd.f32 %v55, %v189
  %v205 = vadd.f32 %v56, %v194
  %v206 = vadd.f32 %v57, %v191
  %v207 = vmul.f32 %v159, 0.109893836
  %v208 = vmul.f32 %v160, 0.109893836
  %v209 = vmul.f32 %v161, 0.109893836
  %v210 = vmul.f32 %v11, 0.109893836
  %v211 = vmul.f32 %v12, 0.109893836
  %v212 = vmul.f32 %v13, 0.109893836
  %v213 = vmul.f32 %v162, 0.109893836
  %v214 = vmul.f32 %v163, 0.109893836
  %v215 = vmul.f32 %v164, 0.109893836
  %v225 = vrot.slane %v207, 1
  %v226 = vrot.slane %v210, 1
  %v227 = vsel %vm173, %v225, %v226
  %v228 = vrot.slane %v208, 1
  %v229 = vrot.slane %v211, 1
  %v230 = vsel %vm173, %v228, %v229
  %v231 = vrot.slane %v209, 1
  %v232 = vrot.slane %v212, 1
  %v233 = vsel %vm173, %v231, %v232
  %v234 = vrot.slane %v213, 1
  %v235 = vsel %vm173, %v226, %v234
  %v236 = vrot.slane %v214, 1
  %v237 = vsel %vm173, %v229, %v236
  %v238 = vrot.slane %v215, 1
  %v239 = vsel %vm173, %v232, %v238
  %240 = vrot.lane.b32.xlu0 %v227, 127
  %v241 = vpop.permute.xlu0 %240
  %242 = vrot.lane.b32.xlu0 %v230, 127
  %v243 = vpop.permute.xlu0 %242
  %244 = vrot.lane.b32.xlu0 %v233, 127
  %v245 = vpop.permute.xlu0 %244
  %246 = vrot.lane.b32.xlu0 %v235, 127
  %v247 = vpop.permute.xlu0 %246
  %248 = vrot.lane.b32.xlu0 %v237, 127
  %v249 = vpop.permute.xlu0 %248
  %250 = vrot.lane.b32.xlu0 %v239, 127
  %v251 = vpop.permute.xlu0 %250
  %vm252 = vcmask 1039360
  %v253 = vsel %vm252, %v241, %v243
  %v254 = vsel %vm252, %v243, %v245
  %v255 = vsel %vm252, %v247, %v249
  %v256 = vsel %vm252, %v249, %v251
  %v261 = vadd.f32 %v85, %v253
  %v262 = vadd.f32 %v86, %v254
  %v263 = vadd.f32 %v87, %v255
  %v264 = vadd.f32 %v88, %v256
  %v265 = vmul.f32 %v159, 0.246255
  %v266 = vmul.f32 %v160, 0.246255
  %v267 = vmul.f32 %v161, 0.246255
  %v268 = vmul.f32 %v11, 0.246255
  %v269 = vmul.f32 %v12, 0.246255
  %v270 = vmul.f32 %v13, 0.246255
  %v271 = vmul.f32 %v162, 0.246255
  %v272 = vmul.f32 %v163, 0.246255
  %v273 = vmul.f32 %v164, 0.246255
  %v283 = vrot.slane %v265, 1
  %v284 = vrot.slane %v268, 1
  %v285 = vsel %vm173, %v283, %v284
  %v286 = vrot.slane %v266, 1
  %v287 = vrot.slane %v269, 1
  %v288 = vsel %vm173, %v286, %v287
  %v289 = vrot.slane %v267, 1
  %v290 = vrot.slane %v270, 1
  %v291 = vsel %vm173, %v289, %v290
  %v292 = vrot.slane %v271, 1
  %v293 = vsel %vm173, %v284, %v292
  %v294 = vrot.slane %v272, 1
  %v295 = vsel %vm173, %v287, %v294
  %v296 = vrot.slane %v273, 1
  %v297 = vsel %vm173, %v290, %v296
  %298 = vrot.lane.b32.xlu0 %v285, 127
  %v299 = vpop.permute.xlu0 %298
  %300 = vrot.lane.b32.xlu0 %v288, 127
  %v301 = vpop.permute.xlu0 %300
  %302 = vrot.lane.b32.xlu0 %v291, 127
  %v303 = vpop.permute.xlu0 %302
  %304 = vrot.lane.b32.xlu0 %v293, 127
  %v305 = vpop.permute.xlu0 %304
  %306 = vrot.lane.b32.xlu0 %v295, 127
  %v307 = vpop.permute.xlu0 %306
  %308 = vrot.lane.b32.xlu0 %v297, 127
  %v309 = vpop.permute.xlu0 %308
  %v310 = vsel %vm252, %v299, %v301
  %v311 = vsel %vm252, %v301, %v303
  %v312 = vsel %vm252, %v305, %v307
  %v313 = vsel %vm252, %v307, %v309
  %v320 = vadd.f32 %v117, %v310
  %v321 = vadd.f32 %v118, %v311
  %v322 = vadd.f32 %v119, %v303
  %v323 = vadd.f32 %v120, %v312
  %v324 = vadd.f32 %v121, %v313
  %v325 = vadd.f32 %v122, %v309
  %v326 = vmul.f32 %v159, 0.2706706
  %v327 = vmul.f32 %v160, 0.2706706
  %v328 = vmul.f32 %v161, 0.2706706
  %v329 = vmul.f32 %v11, 0.2706706
  %v330 = vmul.f32 %v12, 0.2706706
  %v331 = vmul.f32 %v13, 0.2706706
  %v332 = vmul.f32 %v162, 0.2706706
  %v333 = vmul.f32 %v163, 0.2706706
  %v334 = vmul.f32 %v164, 0.2706706
  %v344 = vrot.slane %v326, 1
  %v345 = vrot.slane %v329, 1
  %v346 = vsel %vm173, %v344, %v345
  %v347 = vrot.slane %v327, 1
  %v348 = vrot.slane %v330, 1
  %v349 = vsel %vm173, %v347, %v348
  %v350 = vrot.slane %v328, 1
  %v351 = vrot.slane %v331, 1
  %v352 = vsel %vm173, %v350, %v351
  %v353 = vrot.slane %v332, 1
  %v354 = vsel %vm173, %v345, %v353
  %v355 = vrot.slane %v333, 1
  %v356 = vsel %vm173, %v348, %v355
  %v357 = vrot.slane %v334, 1
  %v358 = vsel %vm173, %v351, %v357
  %359 = vrot.lane.b32.xlu0 %v346, 127
  %v360 = vpop.permute.xlu0 %359
  %361 = vrot.lane.b32.xlu0 %v349, 127
  %v362 = vpop.permute.xlu0 %361
  %363 = vrot.lane.b32.xlu0 %v352, 127
  %v364 = vpop.permute.xlu0 %363
  %365 = vrot.lane.b32.xlu0 %v354, 127
  %v366 = vpop.permute.xlu0 %365
  %367 = vrot.lane.b32.xlu0 %v356, 127
  %v368 = vpop.permute.xlu0 %367
  %369 = vrot.lane.b32.xlu0 %v358, 127
  %v370 = vpop.permute.xlu0 %369
  %v371 = vsel %vm252, %v360, %v362
  %v372 = vsel %vm252, %v362, %v364
  %v373 = vsel %vm252, %v366, %v368
  %v374 = vsel %vm252, %v368, %v370
  %v381 = vadd.f32 %v153, %v371
  %v382 = vadd.f32 %v154, %v372
  %v383 = vadd.f32 %v155, %v364
  %v384 = vadd.f32 %v156, %v373
  %v385 = vadd.f32 %v157, %v374
  %v386 = vadd.f32 %v158, %v370
  %v387 = vadd.f32 %v201, %v310
  %v388 = vadd.f32 %v202, %v311
  %v389 = vadd.f32 %v203, %v303
  %v390 = vadd.f32 %v204, %v312
  %v391 = vadd.f32 %v205, %v313
  %v392 = vadd.f32 %v206, %v309
  %393 = vrot.lane.b32.xlu0 %v227, 123
  %v394 = vpop.permute.xlu0 %393
  %395 = vrot.lane.b32.xlu0 %v230, 123
  %v396 = vpop.permute.xlu0 %395
  %397 = vrot.lane.b32.xlu0 %v233, 123
  %v398 = vpop.permute.xlu0 %397
  %399 = vrot.lane.b32.xlu0 %v235, 123
  %v400 = vpop.permute.xlu0 %399
  %401 = vrot.lane.b32.xlu0 %v237, 123
  %v402 = vpop.permute.xlu0 %401
  %403 = vrot.lane.b32.xlu0 %v239, 123
  %v404 = vpop.permute.xlu0 %403
  %vm405 = vcmask 1006592
  %v406 = vsel %vm405, %v394, %v396
  %v407 = vsel %vm405, %v396, %v398
  %v408 = vsel %vm405, %v400, %v402
  %v409 = vsel %vm405, %v402, %v404
  %v414 = vadd.f32 %v261, %v406
  %v415 = vadd.f32 %v262, %v407
  %v416 = vadd.f32 %v263, %v408
  %v417 = vadd.f32 %v264, %v409
  %v418 = vmul.f32 %v161, 0.016537832
  %v419 = vmul.f32 %v164, 0.016537832
  %v422 = vrot.slane %v418, 1
  %v423 = vrot.slane %v27, 1
  %v424 = vsel %vm173, %v422, %v423
  %v425 = vrot.slane %v419, 1
  %v426 = vsel %vm173, %v423, %v425
  %427 = vrot.lane.b32.xlu0 %v176, 123
  %v428 = vpop.permute.xlu0 %427
  %429 = vrot.lane.b32.xlu0 %v179, 123
  %v430 = vpop.permute.xlu0 %429
  %431 = vrot.lane.b32.xlu0 %v424, 123
  %v432 = vpop.permute.xlu0 %431
  %433 = vrot.lane.b32.xlu0 %v181, 123
  %v434 = vpop.permute.xlu0 %433
  %435 = vrot.lane.b32.xlu0 %v183, 123
  %v436 = vpop.permute.xlu0 %435
  %437 = vrot.lane.b32.xlu0 %v426, 123
  %v438 = vpop.permute.xlu0 %437
  %v439 = vsel %vm405, %v428, %v430
  %v440 = vsel %vm405, %v430, %v432
  %v441 = vsel %vm405, %v434, %v436
  %v442 = vsel %vm405, %v436, %v438
  %v449 = vadd.f32 %v320, %v439
  %v450 = vadd.f32 %v321, %v440
  %v451 = vadd.f32 %v322, %v432
  %v452 = vadd.f32 %v323, %v441
  %v453 = vadd.f32 %v324, %v442
  %v454 = vadd.f32 %v325, %v438
  %v455 = vld [vmem:[%s0] sm:$0xfc]
  %v456 = vld [vmem:[%s0 + $0x8] sm:$0xfc]
  %v457 = vld [vmem:[%s0 + $0x10] sm:$0xfc]
  %v458 = vld [vmem:[%s0 + $0x30] sm:$0x3]
  %v459 = vld [vmem:[%s0 + $0x38] sm:$0x3]
  %v460 = vld [vmem:[%s0 + $0x40] sm:$0x3]
  %v461 = vmul.f32 %v455, 0.053903576
  %v462 = vmul.f32 %v456, 0.053903576
  %v463 = vmul.f32 %v458, 0.053903576
  %v464 = vmul.f32 %v459, 0.053903576
  %vm469 = vcmask 1045504
  %v470 = vrot.slane %v461, 2
  %v471 = vrot.slane %v37, 2
  %v472 = vsel %vm469, %v470, %v471
  %v473 = vrot.slane %v462, 2
  %v474 = vrot.slane %v38, 2
  %v475 = vsel %vm469, %v473, %v474
  %v476 = vrot.slane %v463, 2
  %v477 = vsel %vm469, %v471, %v476
  %v478 = vrot.slane %v464, 2
  %v479 = vsel %vm469, %v474, %v478
  %480 = vrot.lane.b32.xlu0 %v472, 2
  %v481 = vpop.permute.xlu0 %480
  %482 = vrot.lane.b32.xlu0 %v475, 2
  %v483 = vpop.permute.xlu0 %482
  %484 = vrot.lane.b32.xlu0 %v477, 2
  %v485 = vpop.permute.xlu0 %484
  %486 = vrot.lane.b32.xlu0 %v479, 2
  %v487 = vpop.permute.xlu0 %486
  %vm488 = vcmask 15360
  %v489 = vsel %vm488, %v481, %v483
  %v490 = vsel %vm488, %v485, %v487
  %v497 = vadd.f32 %v381, %v481
  %v498 = vadd.f32 %v382, %v489
  %v499 = vadd.f32 %v383, %v483
  %v500 = vadd.f32 %v384, %v485
  %v501 = vadd.f32 %v385, %v490
  %v502 = vadd.f32 %v386, %v487
  %v503 = vmul.f32 %v455, 0.246255
  %v504 = vmul.f32 %v456, 0.246255
  %v505 = vmul.f32 %v457, 0.246255
  %v506 = vmul.f32 %v458, 0.246255
  %v507 = vmul.f32 %v459, 0.246255
  %v508 = vmul.f32 %v460, 0.246255
  %v515 = vrot.slane %v503, 2
  %v516 = vrot.slane %v268, 2
  %v517 = vsel %vm469, %v515, %v516
  %v518 = vrot.slane %v504, 2
  %v519 = vrot.slane %v269, 2
  %v520 = vsel %vm469, %v518, %v519
  %v521 = vrot.slane %v505, 2
  %v522 = vrot.slane %v270, 2
  %v523 = vsel %vm469, %v521, %v522
  %v524 = vrot.slane %v506, 2
  %v525 = vsel %vm469, %v516, %v524
  %v526 = vrot.slane %v507, 2
  %v527 = vsel %vm469, %v519, %v526
  %v528 = vrot.slane %v508, 2
  %v529 = vsel %vm469, %v522, %v528
  %530 = vrot.lane.b32.xlu0 %v517, 2
  %v531 = vpop.permute.xlu0 %530
  %532 = vrot.lane.b32.xlu0 %v520, 2
  %v533 = vpop.permute.xlu0 %532
  %534 = vrot.lane.b32.xlu0 %v523, 2
  %v535 = vpop.permute.xlu0 %534
  %536 = vrot.lane.b32.xlu0 %v525, 2
  %v537 = vpop.permute.xlu0 %536
  %538 = vrot.lane.b32.xlu0 %v527, 2
  %v539 = vpop.permute.xlu0 %538
  %540 = vrot.lane.b32.xlu0 %v529, 2
  %v541 = vpop.permute.xlu0 %540
  %v542 = vsel %vm488, %v531, %v533
  %v543 = vsel %vm488, %v533, %v535
  %v544 = vsel %vm488, %v537, %v539
  %v545 = vsel %vm488, %v539, %v541
  %v552 = vadd.f32 %v387, %v531
  %v553 = vadd.f32 %v388, %v542
  %v554 = vadd.f32 %v389, %v543
  %v555 = vadd.f32 %v390, %v537
  %v556 = vadd.f32 %v391, %v544
  %v557 = vadd.f32 %v392, %v545
  %v558 = vmul.f32 %v455, -0.0
  %v559 = vmul.f32 %v456, -0.0
  %v560 = vmul.f32 %v457, -0.0
  %v561 = vmul.f32 %v11, -0.0
  %v562 = vmul.f32 %v12, -0.0
  %v563 = vmul.f32 %v13, -0.0
  %v564 = vmul.f32 %v458, -0.0
  %v565 = vmul.f32 %v459, -0.0
  %v566 = vmul.f32 %v460, -0.0
  %v576 = vrot.slane %v558, 2
  %v577 = vrot.slane %v561, 2
  %v578 = vsel %vm469, %v576, %v577
  %v579 = vrot.slane %v559, 2
  %v580 = vrot.slane %v562, 2
  %v581 = vsel %vm469, %v579, %v580
  %v582 = vrot.slane %v560, 2
  %v583 = vrot.slane %v563, 2
  %v584 = vsel %vm469, %v582, %v583
  %v585 = vrot.slane %v564, 2
  %v586 = vsel %vm469, %v577, %v585
  %v587 = vrot.slane %v565, 2
  %v588 = vsel %vm469, %v580, %v587
  %v589 = vrot.slane %v566, 2
  %v590 = vsel %vm469, %v583, %v589
  %591 = vrot.lane.b32.xlu0 %v578, 126
  %v592 = vpop.permute.xlu0 %591
  %593 = vrot.lane.b32.xlu0 %v581, 126
  %v594 = vpop.permute.xlu0 %593
  %595 = vrot.lane.b32.xlu0 %v584, 126
  %v596 = vpop.permute.xlu0 %595
  %597 = vrot.lane.b32.xlu0 %v586, 126
  %v598 = vpop.permute.xlu0 %597
  %599 = vrot.lane.b32.xlu0 %v588, 126
  %v600 = vpop.permute.xlu0 %599
  %601 = vrot.lane.b32.xlu0 %v590, 126
  %v602 = vpop.permute.xlu0 %601
  %vm603 = vcmask 1031168
  %v604 = vsel %vm603, %v592, %v594
  %v605 = vsel %vm603, %v594, %v596
  %v606 = vsel %vm603, %v598, %v600
  %v607 = vsel %vm603, %v600, %v602
  %v612 = vadd.f32 %v414, %v604
  %v613 = vadd.f32 %v415, %v605
  %v614 = vadd.f32 %v416, %v606
  %v615 = vadd.f32 %v417, %v607
  %v616 = vmul.f32 %v455, -0.60653067
  %v617 = vmul.f32 %v456, -0.60653067
  %v618 = vmul.f32 %v457, -0.60653067
  %v619 = vmul.f32 %v11, -0.60653067
  %v620 = vmul.f32 %v12, -0.60653067
  %v621 = vmul.f32 %v13, -0.60653067
  %v622 = vmul.f32 %v458, -0.60653067
  %v623 = vmul.f32 %v459, -0.60653067
  %v624 = vmul.f32 %v460, -0.60653067
  %v634 = vrot.slane %v616, 2
  %v635 = vrot.slane %v619, 2
  %v636 = vsel %vm469, %v634, %v635
  %v637 = vrot.slane %v617, 2
  %v638 = vrot.slane %v620, 2
  %v639 = vsel %vm469, %v637, %v638
  %v640 = vrot.slane %v618, 2
  %v641 = vrot.slane %v621, 2
  %v642 = vsel %vm469, %v640, %v641
  %v643 = vrot.slane %v622, 2
  %v644 = vsel %vm469, %v635, %v643
  %v645 = vrot.slane %v623, 2
  %v646 = vsel %vm469, %v638, %v645
  %v647 = vrot.slane %v624, 2
  %v648 = vsel %vm469, %v641, %v647
  %649 = vrot.lane.b32.xlu0 %v636, 126
  %v650 = vpop.permute.xlu0 %649
  %651 = vrot.lane.b32.xlu0 %v639, 126
  %v652 = vpop.permute.xlu0 %651
  %653 = vrot.lane.b32.xlu0 %v642, 126
  %v654 = vpop.permute.xlu0 %653
  %655 = vrot.lane.b32.xlu0 %v644, 126
  %v656 = vpop.permute.xlu0 %655
  %657 = vrot.lane.b32.xlu0 %v646, 126
  %v658 = vpop.permute.xlu0 %657
  %659 = vrot.lane.b32.xlu0 %v648, 126
  %v660 = vpop.permute.xlu0 %659
  %v661 = vsel %vm603, %v650, %v652
  %v662 = vsel %vm603, %v652, %v654
  %v663 = vsel %vm603, %v656, %v658
  %v664 = vsel %vm603, %v658, %v660
  %v671 = vadd.f32 %v449, %v661
  %v672 = vadd.f32 %v450, %v662
  %v673 = vadd.f32 %v451, %v654
  %v674 = vadd.f32 %v452, %v663
  %v675 = vadd.f32 %v453, %v664
  %v676 = vadd.f32 %v454, %v660
  %v679 = vadd.f32 %v497, %v604
  %v680 = vadd.f32 %v498, %v605
  %v681 = vadd.f32 %v499, %v596
  %v682 = vadd.f32 %v500, %v606
  %v683 = vadd.f32 %v501, %v607
  %v684 = vadd.f32 %v502, %v602
  %685 = vrot.lane.b32.xlu0 %v517, 126
  %v686 = vpop.permute.xlu0 %685
  %687 = vrot.lane.b32.xlu0 %v520, 126
  %v688 = vpop.permute.xlu0 %687
  %689 = vrot.lane.b32.xlu0 %v523, 126
  %v690 = vpop.permute.xlu0 %689
  %691 = vrot.lane.b32.xlu0 %v525, 126
  %v692 = vpop.permute.xlu0 %691
  %693 = vrot.lane.b32.xlu0 %v527, 126
  %v694 = vpop.permute.xlu0 %693
  %695 = vrot.lane.b32.xlu0 %v529, 126
  %v696 = vpop.permute.xlu0 %695
  %v697 = vsel %vm603, %v686, %v688
  %v698 = vsel %vm603, %v688, %v690
  %v699 = vsel %vm603, %v692, %v694
  %v700 = vsel %vm603, %v694, %v696
  %v707 = vadd.f32 %v552, %v697
  %v708 = vadd.f32 %v553, %v698
  %v709 = vadd.f32 %v554, %v690
  %v710 = vadd.f32 %v555, %v699
  %v711 = vadd.f32 %v556, %v700
  %v712 = vadd.f32 %v557, %v696
  %v713 = vmul.f32 %v457, 0.053903576
  %v714 = vmul.f32 %v460, 0.053903576
  %v717 = vrot.slane %v713, 2
  %v718 = vrot.slane %v39, 2
  %v719 = vsel %vm469, %v717, %v718
  %v720 = vrot.slane %v714, 2
  %v721 = vsel %vm469, %v718, %v720
  %722 = vrot.lane.b32.xlu0 %v472, 122
  %v723 = vpop.permute.xlu0 %722
  %724 = vrot.lane.b32.xlu0 %v475, 122
  %v725 = vpop.permute.xlu0 %724
  %726 = vrot.lane.b32.xlu0 %v719, 122
  %v727 = vpop.permute.xlu0 %726
  %728 = vrot.lane.b32.xlu0 %v477, 122
  %v729 = vpop.permute.xlu0 %728
  %730 = vrot.lane.b32.xlu0 %v479, 122
  %v731 = vpop.permute.xlu0 %730
  %732 = vrot.lane.b32.xlu0 %v721, 122
  %v733 = vpop.permute.xlu0 %732
  %vm734 = vcmask 998400
  %v735 = vsel %vm734, %v723, %v725
  %v736 = vsel %vm734, %v725, %v727
  %v737 = vsel %vm734, %v729, %v731
  %v738 = vsel %vm734, %v731, %v733
  %v743 = vadd.f32 %v612, %v735
  %v744 = vadd.f32 %v613, %v736
  %v745 = vadd.f32 %v614, %v737
  %v746 = vadd.f32 %v615, %v738
  %v747 = vld [vmem:[%s0] sm:$0xf8]
  %v748 = vld [vmem:[%s0 + $0x8] sm:$0xf8]
  %v749 = vld [vmem:[%s0 + $0x10] sm:$0xf8]
  %v750 = vld [vmem:[%s0 + $0x30] sm:$0x7]
  %v751 = vld [vmem:[%s0 + $0x38] sm:$0x7]
  %v752 = vld [vmem:[%s0 + $0x40] sm:$0x7]
  %v753 = vmul.f32 %v747, 0.07776298
  %v754 = vmul.f32 %v748, 0.07776298
  %v755 = vmul.f32 %v750, 0.07776298
  %v756 = vmul.f32 %v751, 0.07776298
  %vm763 = vcmask 1044480
  %v764 = vrot.slane %v753, 3
  %v765 = vrot.slane %v49, 3
  %v766 = vsel %vm763, %v764, %v765
  %v767 = vrot.slane %v754, 3
  %v768 = vrot.slane %v50, 3
  %v769 = vsel %vm763, %v767, %v768
  %v770 = vrot.slane %v755, 3
  %v771 = vsel %vm763, %v765, %v770
  %v772 = vrot.slane %v756, 3
  %v773 = vsel %vm763, %v768, %v772
  %774 = vrot.lane.b32.xlu0 %v766, 1
  %v775 = vpop.permute.xlu0 %774
  %776 = vrot.lane.b32.xlu0 %v769, 1
  %v777 = vpop.permute.xlu0 %776
  %778 = vrot.lane.b32.xlu0 %v771, 1
  %v779 = vpop.permute.xlu0 %778
  %780 = vrot.lane.b32.xlu0 %v773, 1
  %v781 = vpop.permute.xlu0 %780
  %vm782 = vcmask 7168
  %v783 = vsel %vm782, %v775, %v777
  %v784 = vsel %vm782, %v779, %v781
  %v791 = vadd.f32 %v671, %v775
  %v792 = vadd.f32 %v672, %v783
  %v793 = vadd.f32 %v673, %v777
  %v794 = vadd.f32 %v674, %v779
  %v795 = vadd.f32 %v675, %v784
  %v796 = vadd.f32 %v676, %v781
  %v797 = vmul.f32 %v747, 0.2706706
  %v798 = vmul.f32 %v748, 0.2706706
  %v799 = vmul.f32 %v749, 0.2706706
  %v800 = vmul.f32 %v750, 0.2706706
  %v801 = vmul.f32 %v751, 0.2706706
  %v802 = vmul.f32 %v752, 0.2706706
  %v809 = vrot.slane %v797, 3
  %v810 = vrot.slane %v329, 3
  %v811 = vsel %vm763, %v809, %v810
  %v812 = vrot.slane %v798, 3
  %v813 = vrot.slane %v330, 3
  %v814 = vsel %vm763, %v812, %v813
  %v815 = vrot.slane %v799, 3
  %v816 = vrot.slane %v331, 3
  %v817 = vsel %vm763, %v815, %v816
  %v818 = vrot.slane %v800, 3
  %v819 = vsel %vm763, %v810, %v818
  %v820 = vrot.slane %v801, 3
  %v821 = vsel %vm763, %v813, %v820
  %v822 = vrot.slane %v802, 3
  %v823 = vsel %vm763, %v816, %v822
  %824 = vrot.lane.b32.xlu0 %v811, 1
  %v825 = vpop.permute.xlu0 %824
  %826 = vrot.lane.b32.xlu0 %v814, 1
  %v827 = vpop.permute.xlu0 %826
  %828 = vrot.lane.b32.xlu0 %v817, 1
  %v829 = vpop.permute.xlu0 %828
  %830 = vrot.lane.b32.xlu0 %v819, 1
  %v831 = vpop.permute.xlu0 %830
  %832 = vrot.lane.b32.xlu0 %v821, 1
  %v833 = vpop.permute.xlu0 %832
  %834 = vrot.lane.b32.xlu0 %v823, 1
  %v835 = vpop.permute.xlu0 %834
  %v836 = vsel %vm782, %v825, %v827
  %v837 = vsel %vm782, %v827, %v829
  %v838 = vsel %vm782, %v831, %v833
  %v839 = vsel %vm782, %v833, %v835
  %v846 = vadd.f32 %v679, %v825
  %v847 = vadd.f32 %v680, %v836
  %v848 = vadd.f32 %v681, %v837
  %v849 = vadd.f32 %v682, %v831
  %v850 = vadd.f32 %v683, %v838
  %v851 = vadd.f32 %v684, %v839
  %v852 = vmul.f32 %v747, -0.60653067
  %v853 = vmul.f32 %v748, -0.60653067
  %v854 = vmul.f32 %v749, -0.60653067
  %v855 = vmul.f32 %v750, -0.60653067
  %v856 = vmul.f32 %v751, -0.60653067
  %v857 = vmul.f32 %v752, -0.60653067
  %v864 = vrot.slane %v852, 3
  %v865 = vrot.slane %v619, 3
  %v866 = vsel %vm763, %v864, %v865
  %v867 = vrot.slane %v853, 3
  %v868 = vrot.slane %v620, 3
  %v869 = vsel %vm763, %v867, %v868
  %v870 = vrot.slane %v854, 3
  %v871 = vrot.slane %v621, 3
  %v872 = vsel %vm763, %v870, %v871
  %v873 = vrot.slane %v855, 3
  %v874 = vsel %vm763, %v865, %v873
  %v875 = vrot.slane %v856, 3
  %v876 = vsel %vm763, %v868, %v875
  %v877 = vrot.slane %v857, 3
  %v878 = vsel %vm763, %v871, %v877
  %879 = vrot.lane.b32.xlu0 %v866, 1
  %v880 = vpop.permute.xlu0 %879
  %881 = vrot.lane.b32.xlu0 %v869, 1
  %v882 = vpop.permute.xlu0 %881
  %883 = vrot.lane.b32.xlu0 %v872, 1
  %v884 = vpop.permute.xlu0 %883
  %885 = vrot.lane.b32.xlu0 %v874, 1
  %v886 = vpop.permute.xlu0 %885
  %887 = vrot.lane.b32.xlu0 %v876, 1
  %v888 = vpop.permute.xlu0 %887
  %889 = vrot.lane.b32.xlu0 %v878, 1
  %v890 = vpop.permute.xlu0 %889
  %v891 = vsel %vm782, %v880, %v882
  %v892 = vsel %vm782, %v882, %v884
  %v893 = vsel %vm782, %v886, %v888
  %v894 = vsel %vm782, %v888, %v890
  %v901 = vadd.f32 %v707, %v880
  %v902 = vadd.f32 %v708, %v891
  %v903 = vadd.f32 %v709, %v892
  %v904 = vadd.f32 %v710, %v886
  %v905 = vadd.f32 %v711, %v893
  %v906 = vadd.f32 %v712, %v894
  %v907 = vmul.f32 %v747, -2.0
  %v908 = vmul.f32 %v748, -2.0
  %v909 = vmul.f32 %v749, -2.0
  %v910 = vmul.f32 %v11, -2.0
  %v911 = vmul.f32 %v12, -2.0
  %v912 = vmul.f32 %v13, -2.0
  %v913 = vmul.f32 %v750, -2.0
  %v914 = vmul.f32 %v751, -2.0
  %v915 = vmul.f32 %v752, -2.0
  %v925 = vrot.slane %v907, 3
  %v926 = vrot.slane %v910, 3
  %v927 = vsel %vm763, %v925, %v926
  %v928 = vrot.slane %v908, 3
  %v929 = vrot.slane %v911, 3
  %v930 = vsel %vm763, %v928, %v929
  %v931 = vrot.slane %v909, 3
  %v932 = vrot.slane %v912, 3
  %v933 = vsel %vm763, %v931, %v932
  %v934 = vrot.slane %v913, 3
  %v935 = vsel %vm763, %v926, %v934
  %v936 = vrot.slane %v914, 3
  %v937 = vsel %vm763, %v929, %v936
  %v938 = vrot.slane %v915, 3
  %v939 = vsel %vm763, %v932, %v938
  %940 = vrot.lane.b32.xlu0 %v927, 125
  %v941 = vpop.permute.xlu0 %940
  %942 = vrot.lane.b32.xlu0 %v930, 125
  %v943 = vpop.permute.xlu0 %942
  %944 = vrot.lane.b32.xlu0 %v933, 125
  %v945 = vpop.permute.xlu0 %944
  %946 = vrot.lane.b32.xlu0 %v935, 125
  %v947 = vpop.permute.xlu0 %946
  %948 = vrot.lane.b32.xlu0 %v937, 125
  %v949 = vpop.permute.xlu0 %948
  %950 = vrot.lane.b32.xlu0 %v939, 125
  %v951 = vpop.permute.xlu0 %950
  %vm952 = vcmask 1022976
  %v953 = vsel %vm952, %v941, %v943
  %v954 = vsel %vm952, %v943, %v945
  %v955 = vsel %vm952, %v947, %v949
  %v956 = vsel %vm952, %v949, %v951
  %v961 = vadd.f32 %v743, %v953
  %v962 = vadd.f32 %v744, %v954
  %v963 = vadd.f32 %v745, %v955
  %v964 = vadd.f32 %v746, %v956
  %965 = vrot.lane.b32.xlu0 %v866, 125
  %v966 = vpop.permute.xlu0 %965
  %967 = vrot.lane.b32.xlu0 %v869, 125
  %v968 = vpop.permute.xlu0 %967
  %969 = vrot.lane.b32.xlu0 %v872, 125
  %v970 = vpop.permute.xlu0 %969
  %971 = vrot.lane.b32.xlu0 %v874, 125
  %v972 = vpop.permute.xlu0 %971
  %973 = vrot.lane.b32.xlu0 %v876, 125
  %v974 = vpop.permute.xlu0 %973
  %975 = vrot.lane.b32.xlu0 %v878, 125
  %v976 = vpop.permute.xlu0 %975
  %v977 = vsel %vm952, %v966, %v968
  %v978 = vsel %vm952, %v968, %v970
  %v979 = vsel %vm952, %v972, %v974
  %v980 = vsel %vm952, %v974, %v976
  %v987 = vadd.f32 %v791, %v977
  %v988 = vadd.f32 %v792, %v978
  %v989 = vadd.f32 %v793, %v970
  %v990 = vadd.f32 %v794, %v979
  %v991 = vadd.f32 %v795, %v980
  %v992 = vadd.f32 %v796, %v976
  %993 = vrot.lane.b32.xlu0 %v811, 125
  %v994 = vpop.permute.xlu0 %993
  %995 = vrot.lane.b32.xlu0 %v814, 125
  %v996 = vpop.permute.xlu0 %995
  %997 = vrot.lane.b32.xlu0 %v817, 125
  %v998 = vpop.permute.xlu0 %997
  %999 = vrot.lane.b32.xlu0 %v819, 125
  %v1000 = vpop.permute.xlu0 %999
  %1001 = vrot.lane.b32.xlu0 %v821, 125
  %v1002 = vpop.permute.xlu0 %1001
  %1003 = vrot.lane.b32.xlu0 %v823, 125
  %v1004 = vpop.permute.xlu0 %1003
  %v1005 = vsel %vm952, %v994, %v996
  %v1006 = vsel %vm952, %v996, %v998
  %v1007 = vsel %vm952, %v1000, %v1002
  %v1008 = vsel %vm952, %v1002, %v1004
  %v1015 = vadd.f32 %v846, %v1005
  %v1016 = vadd.f32 %v847, %v1006
  %v1017 = vadd.f32 %v848, %v998
  %v1018 = vadd.f32 %v849, %v1007
  %v1019 = vadd.f32 %v850, %v1008
  %v1020 = vadd.f32 %v851, %v1004
  %v1021 = vmul.f32 %v749, 0.07776298
  %v1022 = vmul.f32 %v752, 0.07776298
  %v1026 = vrot.slane %v1021, 3
  %v1027 = vrot.slane %v51, 3
  %v1028 = vsel %vm763, %v1026, %v1027
  %v1029 = vrot.slane %v1022, 3
  %v1030 = vsel %vm763, %v1027, %v1029
  %1031 = vrot.lane.b32.xlu0 %v766, 125
  %v1032 = vpop.permute.xlu0 %1031
  %1033 = vrot.lane.b32.xlu0 %v769, 125
  %v1034 = vpop.permute.xlu0 %1033
  %1035 = vrot.lane.b32.xlu0 %v1028, 125
  %v1036 = vpop.permute.xlu0 %1035
  %1037 = vrot.lane.b32.xlu0 %v771, 125
  %v1038 = vpop.permute.xlu0 %1037
  %1039 = vrot.lane.b32.xlu0 %v773, 125
  %v1040 = vpop.permute.xlu0 %1039
  %1041 = vrot.lane.b32.xlu0 %v1030, 125
  %v1042 = vpop.permute.xlu0 %1041
  %v1043 = vsel %vm952, %v1032, %v1034
  %v1044 = vsel %vm952, %v1034, %v1036
  %v1045 = vsel %vm952, %v1038, %v1040
  %v1046 = vsel %vm952, %v1040, %v1042
  %v1053 = vadd.f32 %v901, %v1043
  %v1054 = vadd.f32 %v902, %v1044
  %v1055 = vadd.f32 %v903, %v1036
  %v1056 = vadd.f32 %v904, %v1045
  %v1057 = vadd.f32 %v905, %v1046
  %v1058 = vadd.f32 %v906, %v1042
  %v1059 = vld [vmem:[%s0] sm:$0xf0]
  %v1060 = vld [vmem:[%s0 + $0x8] sm:$0xf0]
  %v1061 = vld [vmem:[%s0 + $0x10] sm:$0xf0]
  %v1062 = vld [vmem:[%s0 + $0x30] sm:$0xf]
  %v1063 = vld [vmem:[%s0 + $0x38] sm:$0xf]
  %v1064 = vld [vmem:[%s0 + $0x40] sm:$0xf]
  %v1065 = vmul.f32 %v1059, 0.053903576
  %v1066 = vmul.f32 %v1060, 0.053903576
  %v1067 = vmul.f32 %v1062, 0.053903576
  %v1068 = vmul.f32 %v1063, 0.053903576
  %vm1073 = vcmask 1043456
  %v1074 = vrot.slane %v1065, 4
  %v1075 = vrot.slane %v37, 4
  %v1076 = vsel %vm1073, %v1074, %v1075
  %v1077 = vrot.slane %v1066, 4
  %v1078 = vrot.slane %v38, 4
  %v1079 = vsel %vm1073, %v1077, %v1078
  %v1080 = vrot.slane %v1067, 4
  %v1081 = vsel %vm1073, %v1075, %v1080
  %v1082 = vrot.slane %v1068, 4
  %v1083 = vsel %vm1073, %v1078, %v1082
  %v1088 = vadd.f32 %v961, %v1076
  %v1089 = vadd.f32 %v962, %v1079
  %v1090 = vadd.f32 %v963, %v1081
  %v1091 = vadd.f32 %v964, %v1083
  %v1092 = vmul.f32 %v1059, 0.246255
  %v1093 = vmul.f32 %v1060, 0.246255
  %v1094 = vmul.f32 %v1061, 0.246255
  %v1095 = vmul.f32 %v1062, 0.246255
  %v1096 = vmul.f32 %v1063, 0.246255
  %v1097 = vmul.f32 %v1064, 0.246255
  %v1104 = vrot.slane %v1092, 4
  %v1105 = vrot.slane %v268, 4
  %v1106 = vsel %vm1073, %v1104, %v1105
  %v1107 = vrot.slane %v1093, 4
  %v1108 = vrot.slane %v269, 4
  %v1109 = vsel %vm1073, %v1107, %v1108
  %v1110 = vrot.slane %v1094, 4
  %v1111 = vrot.slane %v270, 4
  %v1112 = vsel %vm1073, %v1110, %v1111
  %v1113 = vrot.slane %v1095, 4
  %v1114 = vsel %vm1073, %v1105, %v1113
  %v1115 = vrot.slane %v1096, 4
  %v1116 = vsel %vm1073, %v1108, %v1115
  %v1117 = vrot.slane %v1097, 4
  %v1118 = vsel %vm1073, %v1111, %v1117
  %v1125 = vadd.f32 %v987, %v1106
  %v1126 = vadd.f32 %v988, %v1109
  %v1127 = vadd.f32 %v989, %v1112
  %v1128 = vadd.f32 %v990, %v1114
  %v1129 = vadd.f32 %v991, %v1116
  %v1130 = vadd.f32 %v992, %v1118
  %v1131 = vmul.f32 %v1059, -0.0
  %v1132 = vmul.f32 %v1060, -0.0
  %v1133 = vmul.f32 %v1061, -0.0
  %v1134 = vmul.f32 %v1062, -0.0
  %v1135 = vmul.f32 %v1063, -0.0
  %v1136 = vmul.f32 %v1064, -0.0
  %v1143 = vrot.slane %v1131, 4
  %v1144 = vrot.slane %v561, 4
  %v1145 = vsel %vm1073, %v1143, %v1144
  %v1146 = vrot.slane %v1132, 4
  %v1147 = vrot.slane %v562, 4
  %v1148 = vsel %vm1073, %v1146, %v1147
  %v1149 = vrot.slane %v1133, 4
  %v1150 = vrot.slane %v563, 4
  %v1151 = vsel %vm1073, %v1149, %v1150
  %v1152 = vrot.slane %v1134, 4
  %v1153 = vsel %vm1073, %v1144, %v1152
  %v1154 = vrot.slane %v1135, 4
  %v1155 = vsel %vm1073, %v1147, %v1154
  %v1156 = vrot.slane %v1136, 4
  %v1157 = vsel %vm1073, %v1150, %v1156
  %v1164 = vadd.f32 %v1015, %v1145
  %v1165 = vadd.f32 %v1016, %v1148
  %v1166 = vadd.f32 %v1017, %v1151
  %v1167 = vadd.f32 %v1018, %v1153
  %v1168 = vadd.f32 %v1019, %v1155
  %v1169 = vadd.f32 %v1020, %v1157
  %v1170 = vmul.f32 %v1059, -0.60653067
  %v1171 = vmul.f32 %v1060, -0.60653067
  %v1172 = vmul.f32 %v1061, -0.60653067
  %v1173 = vmul.f32 %v1062, -0.60653067
  %v1174 = vmul.f32 %v1063, -0.60653067
  %v1175 = vmul.f32 %v1064, -0.60653067
  %v1182 = vrot.slane %v1170, 4
  %v1183 = vrot.slane %v619, 4
  %v1184 = vsel %vm1073, %v1182, %v1183
  %v1185 = vrot.slane %v1171, 4
  %v1186 = vrot.slane %v620, 4
  %v1187 = vsel %vm1073, %v1185, %v1186
  %v1188 = vrot.slane %v1172, 4
  %v1189 = vrot.slane %v621, 4
  %v1190 = vsel %vm1073, %v1188, %v1189
  %v1191 = vrot.slane %v1173, 4
  %v1192 = vsel %vm1073, %v1183, %v1191
  %v1193 = vrot.slane %v1174, 4
  %v1194 = vsel %vm1073, %v1186, %v1193
  %v1195 = vrot.slane %v1175, 4
  %v1196 = vsel %vm1073, %v1189, %v1195
  %v1203 = vadd.f32 %v1053, %v1184
  %v1204 = vadd.f32 %v1054, %v1187
  %v1205 = vadd.f32 %v1055, %v1190
  %v1206 = vadd.f32 %v1056, %v1192
  %v1207 = vadd.f32 %v1057, %v1194
  %v1208 = vadd.f32 %v1058, %v1196
  %1209 = vrot.lane.b32.xlu0 %v1145, 124
  %v1210 = vpop.permute.xlu0 %1209
  %1211 = vrot.lane.b32.xlu0 %v1148, 124
  %v1212 = vpop.permute.xlu0 %1211
  %1213 = vrot.lane.b32.xlu0 %v1151, 124
  %v1214 = vpop.permute.xlu0 %1213
  %1215 = vrot.lane.b32.xlu0 %v1153, 124
  %v1216 = vpop.permute.xlu0 %1215
  %1217 = vrot.lane.b32.xlu0 %v1155, 124
  %v1218 = vpop.permute.xlu0 %1217
  %1219 = vrot.lane.b32.xlu0 %v1157, 124
  %v1220 = vpop.permute.xlu0 %1219
  %v1221 = vsel %vm76, %v1210, %v1212
  %v1222 = vsel %vm76, %v1212, %v1214
  %v1223 = vsel %vm76, %v1216, %v1218
  %v1224 = vsel %vm76, %v1218, %v1220
  %v1229 = vadd.f32 %v1088, %v1221
  %v1230 = vadd.f32 %v1089, %v1222
  %v1231 = vadd.f32 %v1090, %v1223
  %v1232 = vadd.f32 %v1091, %v1224
  %1233 = vrot.lane.b32.xlu0 %v1106, 124
  %v1234 = vpop.permute.xlu0 %1233
  %1235 = vrot.lane.b32.xlu0 %v1109, 124
  %v1236 = vpop.permute.xlu0 %1235
  %1237 = vrot.lane.b32.xlu0 %v1112, 124
  %v1238 = vpop.permute.xlu0 %1237
  %1239 = vrot.lane.b32.xlu0 %v1114, 124
  %v1240 = vpop.permute.xlu0 %1239
  %1241 = vrot.lane.b32.xlu0 %v1116, 124
  %v1242 = vpop.permute.xlu0 %1241
  %1243 = vrot.lane.b32.xlu0 %v1118, 124
  %v1244 = vpop.permute.xlu0 %1243
  %v1245 = vsel %vm76, %v1234, %v1236
  %v1246 = vsel %vm76, %v1236, %v1238
  %v1247 = vsel %vm76, %v1240, %v1242
  %v1248 = vsel %vm76, %v1242, %v1244
  %v1255 = vadd.f32 %v1125, %v1245
  %v1256 = vadd.f32 %v1126, %v1246
  %v1257 = vadd.f32 %v1127, %v1238
  %v1258 = vadd.f32 %v1128, %v1247
  %v1259 = vadd.f32 %v1129, %v1248
  %v1260 = vadd.f32 %v1130, %v1244
  %v1261 = vmul.f32 %v1061, 0.053903576
  %v1262 = vmul.f32 %v1064, 0.053903576
  %v1265 = vrot.slane %v1261, 4
  %v1266 = vrot.slane %v39, 4
  %v1267 = vsel %vm1073, %v1265, %v1266
  %v1268 = vrot.slane %v1262, 4
  %v1269 = vsel %vm1073, %v1266, %v1268
  %1270 = vrot.lane.b32.xlu0 %v1076, 124
  %v1271 = vpop.permute.xlu0 %1270
  %1272 = vrot.lane.b32.xlu0 %v1079, 124
  %v1273 = vpop.permute.xlu0 %1272
  %1274 = vrot.lane.b32.xlu0 %v1267, 124
  %v1275 = vpop.permute.xlu0 %1274
  %1276 = vrot.lane.b32.xlu0 %v1081, 124
  %v1277 = vpop.permute.xlu0 %1276
  %1278 = vrot.lane.b32.xlu0 %v1083, 124
  %v1279 = vpop.permute.xlu0 %1278
  %1280 = vrot.lane.b32.xlu0 %v1269, 124
  %v1281 = vpop.permute.xlu0 %1280
  %v1282 = vsel %vm76, %v1271, %v1273
  %v1283 = vsel %vm76, %v1273, %v1275
  %v1284 = vsel %vm76, %v1277, %v1279
  %v1285 = vsel %vm76, %v1279, %v1281
  %v1292 = vadd.f32 %v1164, %v1282
  %v1293 = vadd.f32 %v1165, %v1283
  %v1294 = vadd.f32 %v1166, %v1275
  %v1295 = vadd.f32 %v1167, %v1284
  %v1296 = vadd.f32 %v1168, %v1285
  %v1297 = vadd.f32 %v1169, %v1281
  %v1298 = vld [vmem:[%s0] sm:$0xe0]
  %v1299 = vld [vmem:[%s0 + $0x8] sm:$0xe0]
  %v1300 = vld [vmem:[%s0 + $0x10] sm:$0xe0]
  %v1301 = vld [vmem:[%s0 + $0x30] sm:$0x1f]
  %v1302 = vld [vmem:[%s0 + $0x38] sm:$0x1f]
  %v1303 = vld [vmem:[%s0 + $0x40] sm:$0x1f]
  %v1304 = vmul.f32 %v1298, 0.016537832
  %v1305 = vmul.f32 %v1299, 0.016537832
  %v1306 = vmul.f32 %v1301, 0.016537832
  %v1307 = vmul.f32 %v1302, 0.016537832
  %vm1312 = vcmask 1042432
  %v1313 = vrot.slane %v1304, 5
  %v1314 = vrot.slane %v25, 5
  %v1315 = vsel %vm1312, %v1313, %v1314
  %v1316 = vrot.slane %v1305, 5
  %v1317 = vrot.slane %v26, 5
  %v1318 = vsel %vm1312, %v1316, %v1317
  %v1319 = vrot.slane %v1306, 5
  %v1320 = vsel %vm1312, %v1314, %v1319
  %v1321 = vrot.slane %v1307, 5
  %v1322 = vsel %vm1312, %v1317, %v1321
  %1323 = vrot.lane.b32.xlu0 %v1315, 3
  %v1324 = vpop.permute.xlu0 %1323
  %1325 = vrot.lane.b32.xlu0 %v1318, 3
  %v1326 = vpop.permute.xlu0 %1325
  %1327 = vrot.lane.b32.xlu0 %v1320, 3
  %v1328 = vpop.permute.xlu0 %1327
  %1329 = vrot.lane.b32.xlu0 %v1322, 3
  %v1330 = vpop.permute.xlu0 %1329
  %v1331 = vsel %vm192, %v1324, %v1326
  %v1332 = vsel %vm192, %v1328, %v1330
  %v1339 = vadd.f32 %v1203, %v1324
  %v1340 = vadd.f32 %v1204, %v1331
  %v1341 = vadd.f32 %v1205, %v1326
  %v1342 = vadd.f32 %v1206, %v1328
  %v1343 = vadd.f32 %v1207, %v1332
  %v1344 = vadd.f32 %v1208, %v1330
  %v1345 = vmul.f32 %v1298, 0.109893836
  %v1346 = vmul.f32 %v1299, 0.109893836
  %v1347 = vmul.f32 %v1300, 0.109893836
  %v1348 = vmul.f32 %v1301, 0.109893836
  %v1349 = vmul.f32 %v1302, 0.109893836
  %v1350 = vmul.f32 %v1303, 0.109893836
  %v1357 = vrot.slane %v1345, 5
  %v1358 = vrot.slane %v210, 5
  %v1359 = vsel %vm1312, %v1357, %v1358
  %v1360 = vrot.slane %v1346, 5
  %v1361 = vrot.slane %v211, 5
  %v1362 = vsel %vm1312, %v1360, %v1361
  %v1363 = vrot.slane %v1347, 5
  %v1364 = vrot.slane %v212, 5
  %v1365 = vsel %vm1312, %v1363, %v1364
  %v1366 = vrot.slane %v1348, 5
  %v1367 = vsel %vm1312, %v1358, %v1366
  %v1368 = vrot.slane %v1349, 5
  %v1369 = vsel %vm1312, %v1361, %v1368
  %v1370 = vrot.slane %v1350, 5
  %v1371 = vsel %vm1312, %v1364, %v1370
  %1372 = vrot.lane.b32.xlu0 %v1359, 127
  %v1373 = vpop.permute.xlu0 %1372
  %1374 = vrot.lane.b32.xlu0 %v1362, 127
  %v1375 = vpop.permute.xlu0 %1374
  %1376 = vrot.lane.b32.xlu0 %v1365, 127
  %v1377 = vpop.permute.xlu0 %1376
  %1378 = vrot.lane.b32.xlu0 %v1367, 127
  %v1379 = vpop.permute.xlu0 %1378
  %1380 = vrot.lane.b32.xlu0 %v1369, 127
  %v1381 = vpop.permute.xlu0 %1380
  %1382 = vrot.lane.b32.xlu0 %v1371, 127
  %v1383 = vpop.permute.xlu0 %1382
  %v1384 = vsel %vm252, %v1373, %v1375
  %v1385 = vsel %vm252, %v1375, %v1377
  %v1386 = vsel %vm252, %v1379, %v1381
  %v1387 = vsel %vm252, %v1381, %v1383
  %v1392 = vadd.f32 %v1229, %v1384
  %v1393 = vadd.f32 %v1230, %v1385
  %v1394 = vadd.f32 %v1231, %v1386
  %v1395 = vadd.f32 %v1232, %v1387
  %v1396 = vmul.f32 %v1298, 0.246255
  %v1397 = vmul.f32 %v1299, 0.246255
  %v1398 = vmul.f32 %v1300, 0.246255
  %v1399 = vmul.f32 %v1301, 0.246255
  %v1400 = vmul.f32 %v1302, 0.246255
  %v1401 = vmul.f32 %v1303, 0.246255
  %v1408 = vrot.slane %v1396, 5
  %v1409 = vrot.slane %v268, 5
  %v1410 = vsel %vm1312, %v1408, %v1409
  %v1411 = vrot.slane %v1397, 5
  %v1412 = vrot.slane %v269, 5
  %v1413 = vsel %vm1312, %v1411, %v1412
  %v1414 = vrot.slane %v1398, 5
  %v1415 = vrot.slane %v270, 5
  %v1416 = vsel %vm1312, %v1414, %v1415
  %v1417 = vrot.slane %v1399, 5
  %v1418 = vsel %vm1312, %v1409, %v1417
  %v1419 = vrot.slane %v1400, 5
  %v1420 = vsel %vm1312, %v1412, %v1419
  %v1421 = vrot.slane %v1401, 5
  %v1422 = vsel %vm1312, %v1415, %v1421
  %1423 = vrot.lane.b32.xlu0 %v1410, 127
  %v1424 = vpop.permute.xlu0 %1423
  %1425 = vrot.lane.b32.xlu0 %v1413, 127
  %v1426 = vpop.permute.xlu0 %1425
  %1427 = vrot.lane.b32.xlu0 %v1416, 127
  %v1428 = vpop.permute.xlu0 %1427
  %1429 = vrot.lane.b32.xlu0 %v1418, 127
  %v1430 = vpop.permute.xlu0 %1429
  %1431 = vrot.lane.b32.xlu0 %v1420, 127
  %v1432 = vpop.permute.xlu0 %1431
  %1433 = vrot.lane.b32.xlu0 %v1422, 127
  %v1434 = vpop.permute.xlu0 %1433
  %v1435 = vsel %vm252, %v1424, %v1426
  %v1436 = vsel %vm252, %v1426, %v1428
  %v1437 = vsel %vm252, %v1430, %v1432
  %v1438 = vsel %vm252, %v1432, %v1434
  %v1445 = vadd.f32 %v1255, %v1435
  %v1446 = vadd.f32 %v1256, %v1436
  %v1447 = vadd.f32 %v1257, %v1428
  %v1448 = vadd.f32 %v1258, %v1437
  %v1449 = vadd.f32 %v1259, %v1438
  %v1450 = vadd.f32 %v1260, %v1434
  %v1451 = vmul.f32 %v1298, 0.2706706
  %v1452 = vmul.f32 %v1299, 0.2706706
  %v1453 = vmul.f32 %v1300, 0.2706706
  %v1454 = vmul.f32 %v1301, 0.2706706
  %v1455 = vmul.f32 %v1302, 0.2706706
  %v1456 = vmul.f32 %v1303, 0.2706706
  %v1463 = vrot.slane %v1451, 5
  %v1464 = vrot.slane %v329, 5
  %v1465 = vsel %vm1312, %v1463, %v1464
  %v1466 = vrot.slane %v1452, 5
  %v1467 = vrot.slane %v330, 5
  %v1468 = vsel %vm1312, %v1466, %v1467
  %v1469 = vrot.slane %v1453, 5
  %v1470 = vrot.slane %v331, 5
  %v1471 = vsel %vm1312, %v1469, %v1470
  %v1472 = vrot.slane %v1454, 5
  %v1473 = vsel %vm1312, %v1464, %v1472
  %v1474 = vrot.slane %v1455, 5
  %v1475 = vsel %vm1312, %v1467, %v1474
  %v1476 = vrot.slane %v1456, 5
  %v1477 = vsel %vm1312, %v1470, %v1476
  %1478 = vrot.lane.b32.xlu0 %v1465, 127
  %v1479 = vpop.permute.xlu0 %1478
  %1480 = vrot.lane.b32.xlu0 %v1468, 127
  %v1481 = vpop.permute.xlu0 %1480
  %1482 = vrot.lane.b32.xlu0 %v1471, 127
  %v1483 = vpop.permute.xlu0 %1482
  %1484 = vrot.lane.b32.xlu0 %v1473, 127
  %v1485 = vpop.permute.xlu0 %1484
  %1486 = vrot.lane.b32.xlu0 %v1475, 127
  %v1487 = vpop.permute.xlu0 %1486
  %1488 = vrot.lane.b32.xlu0 %v1477, 127
  %v1489 = vpop.permute.xlu0 %1488
  %v1490 = vsel %vm252, %v1479, %v1481
  %v1491 = vsel %vm252, %v1481, %v1483
  %v1492 = vsel %vm252, %v1485, %v1487
  %v1493 = vsel %vm252, %v1487, %v1489
  %v1500 = vadd.f32 %v1292, %v1490
  %v1501 = vadd.f32 %v1293, %v1491
  %v1502 = vadd.f32 %v1294, %v1483
  %v1503 = vadd.f32 %v1295, %v1492
  %v1504 = vadd.f32 %v1296, %v1493
  %v1505 = vadd.f32 %v1297, %v1489
  %v1506 = vadd.f32 %v1339, %v1435
  %v1507 = vadd.f32 %v1340, %v1436
  %v1508 = vadd.f32 %v1341, %v1428
  %v1509 = vadd.f32 %v1342, %v1437
  %v1510 = vadd.f32 %v1343, %v1438
  %v1511 = vadd.f32 %v1344, %v1434
  %1512 = vrot.lane.b32.xlu0 %v1359, 123
  %v1513 = vpop.permute.xlu0 %1512
  %1514 = vrot.lane.b32.xlu0 %v1362, 123
  %v1515 = vpop.permute.xlu0 %1514
  %1516 = vrot.lane.b32.xlu0 %v1365, 123
  %v1517 = vpop.permute.xlu0 %1516
  %1518 = vrot.lane.b32.xlu0 %v1367, 123
  %v1519 = vpop.permute.xlu0 %1518
  %1520 = vrot.lane.b32.xlu0 %v1369, 123
  %v1521 = vpop.permute.xlu0 %1520
  %1522 = vrot.lane.b32.xlu0 %v1371, 123
  %v1523 = vpop.permute.xlu0 %1522
  %v1524 = vsel %vm405, %v1513, %v1515
  %v1525 = vsel %vm405, %v1515, %v1517
  %v1526 = vsel %vm405, %v1519, %v1521
  %v1527 = vsel %vm405, %v1521, %v1523
  %v1532 = vadd.f32 %v1392, %v1524
  %v1533 = vadd.f32 %v1393, %v1525
  %v1534 = vadd.f32 %v1394, %v1526
  %v1535 = vadd.f32 %v1395, %v1527
  %v1536 = vmul.f32 %v1300, 0.016537832
  %v1537 = vmul.f32 %v1303, 0.016537832
  %v1540 = vrot.slane %v1536, 5
  %v1541 = vrot.slane %v27, 5
  %v1542 = vsel %vm1312, %v1540, %v1541
  %v1543 = vrot.slane %v1537, 5
  %v1544 = vsel %vm1312, %v1541, %v1543
  %1545 = vrot.lane.b32.xlu0 %v1315, 123
  %v1546 = vpop.permute.xlu0 %1545
  %1547 = vrot.lane.b32.xlu0 %v1318, 123
  %v1548 = vpop.permute.xlu0 %1547
  %1549 = vrot.lane.b32.xlu0 %v1542, 123
  %v1550 = vpop.permute.xlu0 %1549
  %1551 = vrot.lane.b32.xlu0 %v1320, 123
  %v1552 = vpop.permute.xlu0 %1551
  %1553 = vrot.lane.b32.xlu0 %v1322, 123
  %v1554 = vpop.permute.xlu0 %1553
  %1555 = vrot.lane.b32.xlu0 %v1544, 123
  %v1556 = vpop.permute.xlu0 %1555
  %v1557 = vsel %vm405, %v1546, %v1548
  %v1558 = vsel %vm405, %v1548, %v1550
  %v1559 = vsel %vm405, %v1552, %v1554
  %v1560 = vsel %vm405, %v1554, %v1556
  %v1567 = vadd.f32 %v1445, %v1557
  %v1568 = vadd.f32 %v1446, %v1558
  %v1569 = vadd.f32 %v1447, %v1550
  %v1570 = vadd.f32 %v1448, %v1559
  %v1571 = vadd.f32 %v1449, %v1560
  %v1572 = vadd.f32 %v1450, %v1556
  %v1573 = vld [vmem:[%s0] sm:$0xc0]
  %v1574 = vld [vmem:[%s0 + $0x8] sm:$0xc0]
  %v1575 = vld [vmem:[%s0 + $0x10] sm:$0xc0]
  %v1576 = vld [vmem:[%s0 + $0x30] sm:$0x3f]
  %v1577 = vld [vmem:[%s0 + $0x38] sm:$0x3f]
  %v1578 = vld [vmem:[%s0 + $0x40] sm:$0x3f]
  %v1579 = vmul.f32 %v1573, 0.0019745568
  %v1580 = vmul.f32 %v1574, 0.0019745568
  %v1581 = vmul.f32 %v1576, 0.0019745568
  %v1582 = vmul.f32 %v1577, 0.0019745568
  %vm1587 = vcmask 1041408
  %v1588 = vrot.slane %v1579, 6
  %v1589 = vrot.slane %v16, 6
  %v1590 = vsel %vm1587, %v1588, %v1589
  %v1591 = vrot.slane %v1580, 6
  %v1592 = vrot.slane %v17, 6
  %v1593 = vsel %vm1587, %v1591, %v1592
  %v1594 = vrot.slane %v1581, 6
  %v1595 = vsel %vm1587, %v1589, %v1594
  %v1596 = vrot.slane %v1582, 6
  %v1597 = vsel %vm1587, %v1592, %v1596
  %1598 = vrot.lane.b32.xlu0 %v1590, 2
  %v1599 = vpop.permute.xlu0 %1598
  %1600 = vrot.lane.b32.xlu0 %v1593, 2
  %v1601 = vpop.permute.xlu0 %1600
  %1602 = vrot.lane.b32.xlu0 %v1595, 2
  %v1603 = vpop.permute.xlu0 %1602
  %1604 = vrot.lane.b32.xlu0 %v1597, 2
  %v1605 = vpop.permute.xlu0 %1604
  %v1606 = vsel %vm488, %v1599, %v1601
  %v1607 = vsel %vm488, %v1603, %v1605
  %v1614 = vadd.f32 %v1500, %v1599
  %v1615 = vadd.f32 %v1501, %v1606
  %v1616 = vadd.f32 %v1502, %v1601
  %v1617 = vadd.f32 %v1503, %v1603
  %v1618 = vadd.f32 %v1504, %v1607
  %v1619 = vadd.f32 %v1505, %v1605
  %v1620 = vmul.f32 %v1573, 0.016537832
  %v1621 = vmul.f32 %v1574, 0.016537832
  %v1622 = vmul.f32 %v1575, 0.016537832
  %v1623 = vmul.f32 %v1576, 0.016537832
  %v1624 = vmul.f32 %v1577, 0.016537832
  %v1625 = vmul.f32 %v1578, 0.016537832
  %v1632 = vrot.slane %v1620, 6
  %v1633 = vrot.slane %v25, 6
  %v1634 = vsel %vm1587, %v1632, %v1633
  %v1635 = vrot.slane %v1621, 6
  %v1636 = vrot.slane %v26, 6
  %v1637 = vsel %vm1587, %v1635, %v1636
  %v1638 = vrot.slane %v1622, 6
  %v1639 = vrot.slane %v27, 6
  %v1640 = vsel %vm1587, %v1638, %v1639
  %v1641 = vrot.slane %v1623, 6
  %v1642 = vsel %vm1587, %v1633, %v1641
  %v1643 = vrot.slane %v1624, 6
  %v1644 = vsel %vm1587, %v1636, %v1643
  %v1645 = vrot.slane %v1625, 6
  %v1646 = vsel %vm1587, %v1639, %v1645
  %1647 = vrot.lane.b32.xlu0 %v1634, 2
  %v1648 = vpop.permute.xlu0 %1647
  %1649 = vrot.lane.b32.xlu0 %v1637, 2
  %v1650 = vpop.permute.xlu0 %1649
  %1651 = vrot.lane.b32.xlu0 %v1640, 2
  %v1652 = vpop.permute.xlu0 %1651
  %1653 = vrot.lane.b32.xlu0 %v1642, 2
  %v1654 = vpop.permute.xlu0 %1653
  %1655 = vrot.lane.b32.xlu0 %v1644, 2
  %v1656 = vpop.permute.xlu0 %1655
  %1657 = vrot.lane.b32.xlu0 %v1646, 2
  %v1658 = vpop.permute.xlu0 %1657
  %v1659 = vsel %vm488, %v1648, %v1650
  %v1660 = vsel %vm488, %v1650, %v1652
  %v1661 = vsel %vm488, %v1654, %v1656
  %v1662 = vsel %vm488, %v1656, %v1658
  %v1669 = vadd.f32 %v1506, %v1648
  %v1670 = vadd.f32 %v1507, %v1659
  %v1671 = vadd.f32 %v1508, %v1660
  %v1672 = vadd.f32 %v1509, %v1654
  %v1673 = vadd.f32 %v1510, %v1661
  %v1674 = vadd.f32 %v1511, %v1662
  %v1675 = vmul.f32 %v1573, 0.053903576
  %v1676 = vmul.f32 %v1574, 0.053903576
  %v1677 = vmul.f32 %v1575, 0.053903576
  %v1678 = vmul.f32 %v1576, 0.053903576
  %v1679 = vmul.f32 %v1577, 0.053903576
  %v1680 = vmul.f32 %v1578, 0.053903576
  %v1687 = vrot.slane %v1675, 6
  %v1688 = vrot.slane %v37, 6
  %v1689 = vsel %vm1587, %v1687, %v1688
  %v1690 = vrot.slane %v1676, 6
  %v1691 = vrot.slane %v38, 6
  %v1692 = vsel %vm1587, %v1690, %v1691
  %v1693 = vrot.slane %v1677, 6
  %v1694 = vrot.slane %v39, 6
  %v1695 = vsel %vm1587, %v1693, %v1694
  %v1696 = vrot.slane %v1678, 6
  %v1697 = vsel %vm1587, %v1688, %v1696
  %v1698 = vrot.slane %v1679, 6
  %v1699 = vsel %vm1587, %v1691, %v1698
  %v1700 = vrot.slane %v1680, 6
  %v1701 = vsel %vm1587, %v1694, %v1700
  %1702 = vrot.lane.b32.xlu0 %v1689, 126
  %v1703 = vpop.permute.xlu0 %1702
  %1704 = vrot.lane.b32.xlu0 %v1692, 126
  %v1705 = vpop.permute.xlu0 %1704
  %1706 = vrot.lane.b32.xlu0 %v1695, 126
  %v1707 = vpop.permute.xlu0 %1706
  %1708 = vrot.lane.b32.xlu0 %v1697, 126
  %v1709 = vpop.permute.xlu0 %1708
  %1710 = vrot.lane.b32.xlu0 %v1699, 126
  %v1711 = vpop.permute.xlu0 %1710
  %1712 = vrot.lane.b32.xlu0 %v1701, 126
  %v1713 = vpop.permute.xlu0 %1712
  %v1714 = vsel %vm603, %v1703, %v1705
  %v1715 = vsel %vm603, %v1705, %v1707
  %v1716 = vsel %vm603, %v1709, %v1711
  %v1717 = vsel %vm603, %v1711, %v1713
  %v1722 = vadd.f32 %v1532, %v1714
  %v1723 = vadd.f32 %v1533, %v1715
  %v1724 = vadd.f32 %v1534, %v1716
  %v1725 = vadd.f32 %v1535, %v1717
  %v1726 = vmul.f32 %v1573, 0.07776298
  %v1727 = vmul.f32 %v1574, 0.07776298
  %v1728 = vmul.f32 %v1575, 0.07776298
  %v1729 = vmul.f32 %v1576, 0.07776298
  %v1730 = vmul.f32 %v1577, 0.07776298
  %v1731 = vmul.f32 %v1578, 0.07776298
  %v1738 = vrot.slane %v1726, 6
  %v1739 = vrot.slane %v49, 6
  %v1740 = vsel %vm1587, %v1738, %v1739
  %v1741 = vrot.slane %v1727, 6
  %v1742 = vrot.slane %v50, 6
  %v1743 = vsel %vm1587, %v1741, %v1742
  %v1744 = vrot.slane %v1728, 6
  %v1745 = vrot.slane %v51, 6
  %v1746 = vsel %vm1587, %v1744, %v1745
  %v1747 = vrot.slane %v1729, 6
  %v1748 = vsel %vm1587, %v1739, %v1747
  %v1749 = vrot.slane %v1730, 6
  %v1750 = vsel %vm1587, %v1742, %v1749
  %v1751 = vrot.slane %v1731, 6
  %v1752 = vsel %vm1587, %v1745, %v1751
  %1753 = vrot.lane.b32.xlu0 %v1740, 126
  %v1754 = vpop.permute.xlu0 %1753
  %1755 = vrot.lane.b32.xlu0 %v1743, 126
  %v1756 = vpop.permute.xlu0 %1755
  %1757 = vrot.lane.b32.xlu0 %v1746, 126
  %v1758 = vpop.permute.xlu0 %1757
  %1759 = vrot.lane.b32.xlu0 %v1748, 126
  %v1760 = vpop.permute.xlu0 %1759
  %1761 = vrot.lane.b32.xlu0 %v1750, 126
  %v1762 = vpop.permute.xlu0 %1761
  %1763 = vrot.lane.b32.xlu0 %v1752, 126
  %v1764 = vpop.permute.xlu0 %1763
  %v1765 = vsel %vm603, %v1754, %v1756
  %v1766 = vsel %vm603, %v1756, %v1758
  %v1767 = vsel %vm603, %v1760, %v1762
  %v1768 = vsel %vm603, %v1762, %v1764
  %v1775 = vadd.f32 %v1567, %v1765
  %v1776 = vadd.f32 %v1568, %v1766
  %v1777 = vadd.f32 %v1569, %v1758
  %v1778 = vadd.f32 %v1570, %v1767
  %v1779 = vadd.f32 %v1571, %v1768
  %v1780 = vadd.f32 %v1572, %v1764
  %v1783 = vadd.f32 %v1614, %v1714
  %v1784 = vadd.f32 %v1615, %v1715
  %v1785 = vadd.f32 %v1616, %v1707
  %v1786 = vadd.f32 %v1617, %v1716
  %v1787 = vadd.f32 %v1618, %v1717
  %v1788 = vadd.f32 %v1619, %v1713
  %1789 = vrot.lane.b32.xlu0 %v1634, 126
  %v1790 = vpop.permute.xlu0 %1789
  %1791 = vrot.lane.b32.xlu0 %v1637, 126
  %v1792 = vpop.permute.xlu0 %1791
  %1793 = vrot.lane.b32.xlu0 %v1640, 126
  %v1794 = vpop.permute.xlu0 %1793
  %1795 = vrot.lane.b32.xlu0 %v1642, 126
  %v1796 = vpop.permute.xlu0 %1795
  %1797 = vrot.lane.b32.xlu0 %v1644, 126
  %v1798 = vpop.permute.xlu0 %1797
  %1799 = vrot.lane.b32.xlu0 %v1646, 126
  %v1800 = vpop.permute.xlu0 %1799
  %v1801 = vsel %vm603, %v1790, %v1792
  %v1802 = vsel %vm603, %v1792, %v1794
  %v1803 = vsel %vm603, %v1796, %v1798
  %v1804 = vsel %vm603, %v1798, %v1800
  %v1811 = vadd.f32 %v1669, %v1801
  %v1812 = vadd.f32 %v1670, %v1802
  %v1813 = vadd.f32 %v1671, %v1794
  %v1814 = vadd.f32 %v1672, %v1803
  %v1815 = vadd.f32 %v1673, %v1804
  %v1816 = vadd.f32 %v1674, %v1800
  %v1817 = vmul.f32 %v1575, 0.0019745568
  %v1818 = vmul.f32 %v1578, 0.0019745568
  %v1821 = vrot.slane %v1817, 6
  %v1822 = vrot.slane %v124, 6
  %v1823 = vsel %vm1587, %v1821, %v1822
  %v1824 = vrot.slane %v1818, 6
  %v1825 = vsel %vm1587, %v1822, %v1824
  %1826 = vrot.lane.b32.xlu0 %v1590, 122
  %v1827 = vpop.permute.xlu0 %1826
  %1828 = vrot.lane.b32.xlu0 %v1593, 122
  %v1829 = vpop.permute.xlu0 %1828
  %1830 = vrot.lane.b32.xlu0 %v1823, 122
  %v1831 = vpop.permute.xlu0 %1830
  %1832 = vrot.lane.b32.xlu0 %v1595, 122
  %v1833 = vpop.permute.xlu0 %1832
  %1834 = vrot.lane.b32.xlu0 %v1597, 122
  %v1835 = vpop.permute.xlu0 %1834
  %1836 = vrot.lane.b32.xlu0 %v1825, 122
  %v1837 = vpop.permute.xlu0 %1836
  %v1838 = vsel %vm734, %v1827, %v1829
  %v1839 = vsel %vm734, %v1829, %v1831
  %v1840 = vsel %vm734, %v1833, %v1835
  %v1841 = vsel %vm734, %v1835, %v1837
  %v1846 = vadd.f32 %v1722, %v1838
  %v1847 = vadd.f32 %v1723, %v1839
  %v1848 = vadd.f32 %v1724, %v1840
  %v1849 = vadd.f32 %v1725, %v1841
  %1856 = vrot.lane.b32.xlu0 %v1775, 127
  %v1857 = vpop.permute.xlu0 %1856
  %1858 = vrot.lane.b32.xlu0 %v1776, 127
  %v1859 = vpop.permute.xlu0 %1858
  %1860 = vrot.lane.b32.xlu0 %v1777, 127
  %v1861 = vpop.permute.xlu0 %1860
  %1862 = vrot.lane.b32.xlu0 %v1778, 127
  %v1863 = vpop.permute.xlu0 %1862
  %1864 = vrot.lane.b32.xlu0 %v1779, 127
  %v1865 = vpop.permute.xlu0 %1864
  %1866 = vrot.lane.b32.xlu0 %v1780, 127
  %v1867 = vpop.permute.xlu0 %1866
  %v1868 = vsel %vm252, %v1857, %v1859
  %v1869 = vsel %vm252, %v1859, %v1861
  %v1870 = vsel %vm252, %v1863, %v1865
  %v1871 = vsel %vm252, %v1865, %v1867
  %v1876 = vadd.f32 %v1846, %v1868
  %v1877 = vadd.f32 %v1847, %v1869
  %v1878 = vadd.f32 %v1848, %v1870
  %v1879 = vadd.f32 %v1849, %v1871
  %1886 = vrot.lane.b32.xlu0 %v1811, 127
  %v1887 = vpop.permute.xlu0 %1886
  %1888 = vrot.lane.b32.xlu0 %v1812, 127
  %v1889 = vpop.permute.xlu0 %1888
  %1890 = vrot.lane.b32.xlu0 %v1813, 127
  %v1891 = vpop.permute.xlu0 %1890
  %1892 = vrot.lane.b32.xlu0 %v1814, 127
  %v1893 = vpop.permute.xlu0 %1892
  %1894 = vrot.lane.b32.xlu0 %v1815, 127
  %v1895 = vpop.permute.xlu0 %1894
  %1896 = vrot.lane.b32.xlu0 %v1816, 127
  %v1897 = vpop.permute.xlu0 %1896
  %v1898 = vsel %vm252, %v1887, %v1889
  %v1899 = vsel %vm252, %v1889, %v1891
  %v1900 = vsel %vm252, %v1893, %v1895
  %v1901 = vsel %vm252, %v1895, %v1897
  %v1908 = vadd.f32 %v1783, %v1898
  %v1909 = vadd.f32 %v1784, %v1899
  %v1910 = vadd.f32 %v1785, %v1891
  %v1911 = vadd.f32 %v1786, %v1900
  %v1912 = vadd.f32 %v1787, %v1901
  %v1913 = vadd.f32 %v1788, %v1897
  %1920 = vrot.lane.b32.xlu0 %v1908, 126
  %v1921 = vpop.permute.xlu0 %1920
  %1922 = vrot.lane.b32.xlu0 %v1909, 126
  %v1923 = vpop.permute.xlu0 %1922
  %1924 = vrot.lane.b32.xlu0 %v1910, 126
  %v1925 = vpop.permute.xlu0 %1924
  %1926 = vrot.lane.b32.xlu0 %v1911, 126
  %v1927 = vpop.permute.xlu0 %1926
  %1928 = vrot.lane.b32.xlu0 %v1912, 126
  %v1929 = vpop.permute.xlu0 %1928
  %1930 = vrot.lane.b32.xlu0 %v1913, 126
  %v1931 = vpop.permute.xlu0 %1930
  %v1932 = vsel %vm603, %v1921, %v1923
  %v1933 = vsel %vm603, %v1923, %v1925
  %v1934 = vsel %vm603, %v1927, %v1929
  %v1935 = vsel %vm603, %v1929, %v1931
  %v1940 = vadd.f32 %v1876, %v1932
  %v1941 = vadd.f32 %v1877, %v1933
  %v1942 = vadd.f32 %v1878, %v1934
  %v1943 = vadd.f32 %v1879, %v1935
  %v1944 = vtanh.pop %v1940
  %v1945 = vtanh.pop %v1941
  %v1946 = vtanh.pop %v1942
  %v1947 = vtanh.pop %v1943
  %1948 = vst [vmem:[%s1] sm:$0xff] %v1944
  %1949 = vst [vmem:[%s1 + $0x8] sm:$0xff] %v1945
  %1950 = vst [vmem:[%s1 + $0x10] sm:$0xff] %v1946
  %1951 = vst [vmem:[%s1 + $0x18] sm:$0xff] %v1947
  // Predicated region
  $region6: #{run.1} parent=0 // pred_check
    _
  $region7: #{run.1} parent=0 // pred_check_branch
    %1953 = sbr.rel (0) target = $region9
  $region8: #{run.1} parent=0 // pred_region
    _
  $region9: #{run.1} parent=0 // pred_fallthru
    _
  // Predicated region
  $region10: #{run.1} parent=0 // pred_check
    _
  $region11: #{run.1} parent=0 // pred_check_branch
    %1955 = sbr.rel (0) target = $region13
  $region12: #{run.1} parent=0 // pred_region
    _
  $region13: #{run.1} parent=0 // pred_fallthru
    _

</llo_original>
